<compile_context>
chip_gen: v5e
topology: v5e:2x2
jax: 0.10.0
libtpu: 0.0.40
codegen_flags: <defaults>
</compile_context>

<pallas_src>
import math
import functools

import jax
import jax.numpy as jnp
from jax.experimental import pallas as pl
from jax.experimental.pallas import tpu as pltpu

# ---- config (mirrors __C) -------------------------------------------------
HIDDEN_SIZE = 32
MULTI_HEAD = 4
HEAD_DIM = HIDDEN_SIZE // MULTI_HEAD
DROPOUT_R = 0.1            # dropout is the identity in eval mode
NEG_INF = -1e9             # torch masked_fill value


def _mha_kernel(q_ref, k_ref, v_ref, kmask_ref,
                wq_ref, bq_ref, wk_ref, bk_ref, wv_ref, bv_ref,
                wm_ref, bm_ref, out_ref, *, num_heads, seq_len, block_b):
    S = seq_len
    GBS = block_b * S
    H = q_ref.shape[-1]
    dH = H // num_heads

    # Q/K/V projections: three (GBS, H) @ (H, H) MXU matmuls, bias fused.
    # 1/sqrt(dH) is already folded into wq_ref / bq_ref by the wrapper.
    xq = q_ref[...].reshape(GBS, H)
    xk = k_ref[...].reshape(GBS, H)
    xv = v_ref[...].reshape(GBS, H)
    q_proj = jnp.dot(xq, wq_ref[...], preferred_element_type=jnp.float32) + bq_ref[...]
    k_proj = jnp.dot(xk, wk_ref[...], preferred_element_type=jnp.float32) + bk_ref[...]
    v_proj = jnp.dot(xv, wv_ref[...], preferred_element_type=jnp.float32) + bv_ref[...]

    q3 = q_proj.reshape(block_b, S, H)
    k3 = k_proj.reshape(block_b, S, H)
    v3 = v_proj.reshape(block_b, S, H)

    # Key-padding mask with masked_fill(-1e9) semantics, shared by every head;
    # compare/expand hoisted out of the head loop, broadcast over query rows.
    masked = kmask_ref[0][:, None, :] > 0.0                # (block_b, 1, S)

    wmt = wm_ref[...]                                      # (H, H) == Wm^T
    out = None
    for h in range(num_heads):                             # static unroll (nH small)
        lo = h * dH
        q_h = q3[:, :, lo:lo + dH]                         # (block_b, S, dH)
        k_h = k3[:, :, lo:lo + dH]
        v_h = v3[:, :, lo:lo + dH]

        # Grouped attention: one (S, S) score tile per batch element in the
        # block — no cross-group entries, no giant R x R intermediates.
        s = jnp.einsum('bqd,bkd->bqk', q_h, k_h,
                       preferred_element_type=jnp.float32)
        s = jnp.where(masked, NEG_INF, s)

        m = jnp.max(s, axis=-1, keepdims=True)
        e = jnp.exp(s - m)
        att = e / jnp.sum(e, axis=-1, keepdims=True)
        # TODO(synk): training-mode dropout on the attention map
        # (pltpu.prng_seed / prng_random_bits) is not implemented; eval-mode
        # dropout is the identity.

        ctx_h = jnp.einsum('bqk,bkd->bqd', att, v_h,
                           preferred_element_type=jnp.float32)

        # Head-merge contribution: (GBS, dH) @ (dH, H) sublane slice of Wm^T —
        # no lane-axis concatenation of per-head context chunks needed.
        contrib = jnp.dot(ctx_h.reshape(GBS, dH), wmt[lo:lo + dH, :],
                          preferred_element_type=jnp.float32)
        out = contrib if out is None else out + contrib

    out = out + bm_ref[...]
    out_ref[...] = out.reshape(block_b, S, H).astype(out_ref.dtype)


def _vmem_capacity_bytes():
    try:
        return int(pltpu.get_tpu_info().vmem_capacity_bytes)
    except Exception:
        return 64 * 1024 * 1024        # conservative floor (v7x per-core VMEM)


def _pick_block_b(B, S, H, num_heads, itemsize=4):
    """Largest batch block that fits a VMEM budget while keeping >= 2 grid
    steps on the single 'parallel' axis (so v7x's two TensorCores both get
    work).  On 1-TC chips the same heuristic simply amortizes per-step
    overhead with as large a block as the budget allows."""
    budget = _vmem_capacity_bytes() // 4          # headroom for double buffering
    dH = H // num_heads

    def fits(bb):
        gbs = bb * S
        live = (7 * gbs * H                       # q/k/v blocks + projections + out
                + 3 * bb * S * S                  # scores / exp / att (one head live)
                + bb * S * dH)                    # ctx
        return 2 * live * itemsize <= budget

    best = 1
    for bb in range(1, B + 1):
        if B % bb:
            continue
        if not fits(bb):
            continue
        if B >= 2 and (B // bb) < 2:              # keep >= 2 parallel grid steps
            continue
        best = bb
    return best


def multi_head_att(value, key, query, mask, params, block_b=None):
    """value/key/query: [B, S, H] f32; mask: [B, 1, 1, S] (nonzero = masked)."""
    B, S, H = query.shape
    nH = MULTI_HEAD
    dH = H // nH
    if block_b is None:
        block_b = _pick_block_b(B, S, H, nH, jnp.dtype(query.dtype).itemsize)
    assert B % block_b == 0
    num_blocks = B // block_b

    (wv, bv, wk, bk, wq, bq, wm, bm) = params
    dtype = query.dtype
    scale = 1.0 / math.sqrt(dH)

    # --- wrapper-side constant folding / layout (cheap, (H,H) weights only) ---
    wq_t = (wq.T * scale).astype(dtype)              # fold 1/sqrt(dH) into Wq^T ...
    bq_s = (bq * scale).reshape(1, H).astype(dtype)  # ... and into bq
    wk_t = wk.T.astype(dtype)
    bk_2 = bk.reshape(1, H).astype(dtype)
    wv_t = wv.T.astype(dtype)
    bv_2 = bv.reshape(1, H).astype(dtype)
    wm_t = wm.T.astype(dtype)
    bm_2 = bm.reshape(1, H).astype(dtype)

    # Key mask per block: (num_blocks, block_b, S), nonzero = masked.
    kmask = mask.reshape(B, S).reshape(num_blocks, block_b, S).astype(jnp.float32)

    kernel = functools.partial(_mha_kernel, num_heads=nH, seq_len=S,
                               block_b=block_b)

    vmem_cap = _vmem_capacity_bytes()
    out = pl.pallas_call(
        kernel,
        out_shape=jax.ShapeDtypeStruct((B, S, H), dtype),
        grid_spec=pltpu.PrefetchScalarGridSpec(
            num_scalar_prefetch=0,
            grid=(num_blocks,),
            in_specs=[
                pl.BlockSpec((block_b, S, H), lambda i: (i, 0, 0)),   # query
                pl.BlockSpec((block_b, S, H), lambda i: (i, 0, 0)),   # key
                pl.BlockSpec((block_b, S, H), lambda i: (i, 0, 0)),   # value
                pl.BlockSpec((1, block_b, S), lambda i: (i, 0, 0)),   # key mask
                pl.BlockSpec((H, H), lambda i: (0, 0)),               # Wq^T * scale
                pl.BlockSpec((1, H), lambda i: (0, 0)),               # bq * scale
                pl.BlockSpec((H, H), lambda i: (0, 0)),               # Wk^T
                pl.BlockSpec((1, H), lambda i: (0, 0)),               # bk
                pl.BlockSpec((H, H), lambda i: (0, 0)),               # Wv^T
                pl.BlockSpec((1, H), lambda i: (0, 0)),               # bv
                pl.BlockSpec((H, H), lambda i: (0, 0)),               # Wm^T
                pl.BlockSpec((1, H), lambda i: (0, 0)),               # bm
            ],
            out_specs=pl.BlockSpec((block_b, S, H), lambda i: (i, 0, 0)),
        ),
        compiler_params=pltpu.CompilerParams(
            dimension_semantics=("parallel",),
            vmem_limit_bytes=int(min(vmem_cap, 128 * 1024 * 1024) // 2),
        ),
    )(query, key, value, kmask,
      wq_t, bq_s, wk_t, bk_2, wv_t, bv_2, wm_t, bm_2)
    return out


def _reference(value, key, query, mask, params):
    """Pure-JAX replica of the PyTorch forward for verification."""
    (wv, bv, wk, bk, wq, bq, wm, bm) = params
    B, S, H = query.shape
    nH, dH = MULTI_HEAD, H // MULTI_HEAD

    def lin(x, w, b):
        return x @ w.T + b

    def split(x):  # [B,S,H] -> [B,nH,S,dH]
        return x.reshape(B, S, nH, dH).transpose(0, 2, 1, 3)

    v = split(lin(value, wv, bv))
    k = split(lin(key, wk, bk))
    q = split(lin(query, wq, bq))

    scores = jnp.einsum("bhqd,bhkd->bhqk", q, k) / math.sqrt(dH)
    scores = jnp.where(mask > 0.0, NEG_INF, scores)  # mask [B,1,1,S] broadcasts
    att = jax.nn.softmax(scores, axis=-1)
    ctx = jnp.einsum("bhqk,bhkd->bhqd", att, v)
    ctx = ctx.transpose(0, 2, 1, 3).reshape(B, S, H)
    return lin(ctx, wm, bm)


if __name__ == "__main__":
    B, S, H = 2, 8, HIDDEN_SIZE
    key0 = jax.random.PRNGKey(0)
    ks = jax.random.split(key0, 12)

    scale = 1.0 / math.sqrt(H)
    wv = jax.random.uniform(ks[0], (H, H), jnp.float32, -scale, scale)
    bv = jax.random.uniform(ks[1], (H,), jnp.float32, -scale, scale)
    wk = jax.random.uniform(ks[2], (H, H), jnp.float32, -scale, scale)
    bk = jax.random.uniform(ks[3], (H,), jnp.float32, -scale, scale)
    wq = jax.random.uniform(ks[4], (H, H), jnp.float32, -scale, scale)
    bq = jax.random.uniform(ks[5], (H,), jnp.float32, -scale, scale)
    wm = jax.random.uniform(ks[6], (H, H), jnp.float32, -scale, scale)
    bm = jax.random.uniform(ks[7], (H,), jnp.float32, -scale, scale)
    params = (wv, bv, wk, bk, wq, bq, wm, bm)

    value = jax.random.normal(ks[8], (B, S, H), jnp.float32)
    key_in = jax.random.normal(ks[9], (B, S, H), jnp.float32)
    query = jax.random.normal(ks[10], (B, S, H), jnp.float32)
    # mask: last 2 key positions of batch 1 are masked (1.0 == True in torch mask)
    mask = jnp.zeros((B, 1, 1, S), jnp.float32).at[1, 0, 0, -2:].set(1.0)

    out = multi_head_att(value, key_in, query, mask, params)
    out = jax.block_until_ready(out)

    ref = _reference(value, key_in, query, mask, params)
    assert out.shape == (B, S, H)
    # tolerance covers MXU f32 multi-pass vs XLA default-precision reference
    # matmuls; softmax itself uses an exact divide (no approx reciprocal).
    assert jnp.allclose(out, ref, atol=2e-3, rtol=2e-3), "mismatch vs reference"

    print("KERNEL_OK")
</pallas_src>

<mosaic_0001>
module attributes {stable_mosaic.version = 11 : i64} {
  func.func @_mha_kernel(%arg0: i32, %arg1: memref<1x8x32xf32, #tpu.memory_space<vmem>>, %arg2: memref<1x8x32xf32, #tpu.memory_space<vmem>>, %arg3: memref<1x8x32xf32, #tpu.memory_space<vmem>>, %arg4: memref<1x1x8xf32, #tpu.memory_space<vmem>>, %arg5: memref<32x32xf32, #tpu.memory_space<vmem>>, %arg6: memref<1x32xf32, #tpu.memory_space<vmem>>, %arg7: memref<32x32xf32, #tpu.memory_space<vmem>>, %arg8: memref<1x32xf32, #tpu.memory_space<vmem>>, %arg9: memref<32x32xf32, #tpu.memory_space<vmem>>, %arg10: memref<1x32xf32, #tpu.memory_space<vmem>>, %arg11: memref<32x32xf32, #tpu.memory_space<vmem>>, %arg12: memref<1x32xf32, #tpu.memory_space<vmem>>, %arg13: memref<1x8x32xf32, #tpu.memory_space<vmem>>) attributes {dimension_semantics = [#tpu.dimension_semantics<parallel>], iteration_bounds = array<i64: 2>, scalar_prefetch = 0 : i64, scratch_operands = 0 : i64, tpu.core_type = #tpu.core_type<tc>, window_params = [{transform_indices = @transform_0, window_bounds = array<i64: 1, 8, 32>}, {transform_indices = @transform_1, window_bounds = array<i64: 1, 8, 32>}, {transform_indices = @transform_2, window_bounds = array<i64: 1, 8, 32>}, {transform_indices = @transform_3, window_bounds = array<i64: 1, 1, 8>}, {pipeline_mode = #tpu.pipeline_mode<synchronous>, transform_indices = @transform_4, window_bounds = array<i64: 32, 32>}, {pipeline_mode = #tpu.pipeline_mode<synchronous>, transform_indices = @transform_5, window_bounds = array<i64: 1, 32>}, {pipeline_mode = #tpu.pipeline_mode<synchronous>, transform_indices = @transform_6, window_bounds = array<i64: 32, 32>}, {pipeline_mode = #tpu.pipeline_mode<synchronous>, transform_indices = @transform_7, window_bounds = array<i64: 1, 32>}, {pipeline_mode = #tpu.pipeline_mode<synchronous>, transform_indices = @transform_8, window_bounds = array<i64: 32, 32>}, {pipeline_mode = #tpu.pipeline_mode<synchronous>, transform_indices = @transform_9, window_bounds = array<i64: 1, 32>}, {pipeline_mode = #tpu.pipeline_mode<synchronous>, transform_indices = @transform_10, window_bounds = array<i64: 32, 32>}, {pipeline_mode = #tpu.pipeline_mode<synchronous>, transform_indices = @transform_11, window_bounds = array<i64: 1, 32>}, {transform_indices = @transform_12, window_bounds = array<i64: 1, 8, 32>}]} {
    %c0 = arith.constant 0 : index
    %c0_0 = arith.constant 0 : index
    %c0_1 = arith.constant 0 : index
    %0 = vector.load %arg1[%c0, %c0_0, %c0_1] : memref<1x8x32xf32, #tpu.memory_space<vmem>>, vector<1x8x32xf32>
    %1 = vector.shape_cast %0 : vector<1x8x32xf32> to vector<8x32xf32>
    %c0_2 = arith.constant 0 : index
    %c0_3 = arith.constant 0 : index
    %c0_4 = arith.constant 0 : index
    %2 = vector.load %arg2[%c0_2, %c0_3, %c0_4] : memref<1x8x32xf32, #tpu.memory_space<vmem>>, vector<1x8x32xf32>
    %3 = vector.shape_cast %2 : vector<1x8x32xf32> to vector<8x32xf32>
    %c0_5 = arith.constant 0 : index
    %c0_6 = arith.constant 0 : index
    %c0_7 = arith.constant 0 : index
    %4 = vector.load %arg3[%c0_5, %c0_6, %c0_7] : memref<1x8x32xf32, #tpu.memory_space<vmem>>, vector<1x8x32xf32>
    %5 = vector.shape_cast %4 : vector<1x8x32xf32> to vector<8x32xf32>
    %c0_8 = arith.constant 0 : index
    %c0_9 = arith.constant 0 : index
    %6 = vector.load %arg5[%c0_8, %c0_9] : memref<32x32xf32, #tpu.memory_space<vmem>>, vector<32x32xf32>
    %cst = arith.constant dense<0.000000e+00> : vector<8x32xf32>
    %7 = tpu.matmul %1, %6, %cst {dimension_numbers = #tpu.dot_dimension_numbers<[1], [0], [0], [1], [0, 0, 1, 1], [], []>} : vector<8x32xf32>, vector<32x32xf32>, vector<8x32xf32> -> vector<8x32xf32>
    %c0_10 = arith.constant 0 : index
    %c0_11 = arith.constant 0 : index
    %8 = vector.load %arg6[%c0_10, %c0_11] : memref<1x32xf32, #tpu.memory_space<vmem>>, vector<1x32xf32>
    %9 = vector.broadcast %8 : vector<1x32xf32> to vector<8x32xf32>
    %10 = arith.addf %7, %9 : vector<8x32xf32>
    %c0_12 = arith.constant 0 : index
    %c0_13 = arith.constant 0 : index
    %11 = vector.load %arg7[%c0_12, %c0_13] : memref<32x32xf32, #tpu.memory_space<vmem>>, vector<32x32xf32>
    %cst_14 = arith.constant dense<0.000000e+00> : vector<8x32xf32>
    %12 = tpu.matmul %3, %11, %cst_14 {dimension_numbers = #tpu.dot_dimension_numbers<[1], [0], [0], [1], [0, 0, 1, 1], [], []>} : vector<8x32xf32>, vector<32x32xf32>, vector<8x32xf32> -> vector<8x32xf32>
    %c0_15 = arith.constant 0 : index
    %c0_16 = arith.constant 0 : index
    %13 = vector.load %arg8[%c0_15, %c0_16] : memref<1x32xf32, #tpu.memory_space<vmem>>, vector<1x32xf32>
    %14 = vector.broadcast %13 : vector<1x32xf32> to vector<8x32xf32>
    %15 = arith.addf %12, %14 : vector<8x32xf32>
    %c0_17 = arith.constant 0 : index
    %c0_18 = arith.constant 0 : index
    %16 = vector.load %arg9[%c0_17, %c0_18] : memref<32x32xf32, #tpu.memory_space<vmem>>, vector<32x32xf32>
    %cst_19 = arith.constant dense<0.000000e+00> : vector<8x32xf32>
    %17 = tpu.matmul %5, %16, %cst_19 {dimension_numbers = #tpu.dot_dimension_numbers<[1], [0], [0], [1], [0, 0, 1, 1], [], []>} : vector<8x32xf32>, vector<32x32xf32>, vector<8x32xf32> -> vector<8x32xf32>
    %c0_20 = arith.constant 0 : index
    %c0_21 = arith.constant 0 : index
    %18 = vector.load %arg10[%c0_20, %c0_21] : memref<1x32xf32, #tpu.memory_space<vmem>>, vector<1x32xf32>
    %19 = vector.broadcast %18 : vector<1x32xf32> to vector<8x32xf32>
    %20 = arith.addf %17, %19 : vector<8x32xf32>
    %21 = vector.shape_cast %10 : vector<8x32xf32> to vector<1x8x32xf32>
    %22 = vector.shape_cast %15 : vector<8x32xf32> to vector<1x8x32xf32>
    %23 = vector.shape_cast %20 : vector<8x32xf32> to vector<1x8x32xf32>
    %c0_22 = arith.constant 0 : index
    %c0_23 = arith.constant 0 : index
    %c0_24 = arith.constant 0 : index
    %24 = vector.load %arg4[%c0_22, %c0_23, %c0_24] : memref<1x1x8xf32, #tpu.memory_space<vmem>>, vector<1x1x8xf32>
    %25 = vector.shape_cast %24 : vector<1x1x8xf32> to vector<1x8xf32>
    %26 = vector.shape_cast %25 : vector<1x8xf32> to vector<1x1x8xf32>
    %cst_25 = arith.constant 0.000000e+00 : f32
    %27 = vector.broadcast %cst_25 : f32 to vector<1x1x8xf32>
    %28 = arith.cmpf ogt, %26, %27 : vector<1x1x8xf32>
    %c0_26 = arith.constant 0 : index
    %c0_27 = arith.constant 0 : index
    %29 = vector.load %arg11[%c0_26, %c0_27] : memref<32x32xf32, #tpu.memory_space<vmem>>, vector<32x32xf32>
    %30 = vector.extract_strided_slice %21 {offsets = [0, 0, 0], sizes = [1, 8, 8], strides = [1, 1, 1]} : vector<1x8x32xf32> to vector<1x8x8xf32>
    %31 = vector.extract_strided_slice %22 {offsets = [0, 0, 0], sizes = [1, 8, 8], strides = [1, 1, 1]} : vector<1x8x32xf32> to vector<1x8x8xf32>
    %32 = vector.extract_strided_slice %23 {offsets = [0, 0, 0], sizes = [1, 8, 8], strides = [1, 1, 1]} : vector<1x8x32xf32> to vector<1x8x8xf32>
    "tpu.trace_start"() <{level = 10 : i32, message = "bqd,bkd->bqk"}> : () -> ()
    %cst_28 = arith.constant dense<0.000000e+00> : vector<1x8x8xf32>
    %33 = tpu.matmul %30, %31, %cst_28 {dimension_numbers = #tpu.dot_dimension_numbers<[2], [2], [1], [1], [0, 0, 0, 1, 1, 1], [0], [0]>} : vector<1x8x8xf32>, vector<1x8x8xf32>, vector<1x8x8xf32> -> vector<1x8x8xf32>
    %cst_29 = arith.constant -1.000000e+09 : f32
    "tpu.trace_stop"() : () -> ()
    %34 = vector.shape_cast %28 : vector<1x1x8xi1> to vector<1x1x8xi1>
    %35 = vector.broadcast %34 : vector<1x1x8xi1> to vector<1x8x8xi1>
    %36 = vector.broadcast %cst_29 : f32 to vector<1x8x8xf32>
    %37 = arith.select %35, %36, %33 : vector<1x8x8xi1>, vector<1x8x8xf32>
    %cst_30 = arith.constant dense<0xFF800000> : vector<1x8xf32>
    %38 = vector.multi_reduction <maximumf>, %37, %cst_30 [2] : vector<1x8x8xf32> to vector<1x8xf32>
    %39 = vector.shape_cast %38 : vector<1x8xf32> to vector<1x8x1xf32>
    %40 = vector.broadcast %39 : vector<1x8x1xf32> to vector<1x8x8xf32>
    %41 = arith.subf %37, %40 : vector<1x8x8xf32>
    %42 = math.exp %41 : vector<1x8x8xf32>
    %cst_31 = arith.constant dense<0.000000e+00> : vector<1x8xf32>
    %43 = vector.multi_reduction <add>, %42, %cst_31 [2] : vector<1x8x8xf32> to vector<1x8xf32>
    %44 = vector.shape_cast %43 : vector<1x8xf32> to vector<1x8x1xf32>
    %45 = vector.broadcast %44 : vector<1x8x1xf32> to vector<1x8x8xf32>
    %46 = arith.divf %42, %45 : vector<1x8x8xf32>
    "tpu.trace_start"() <{level = 10 : i32, message = "bqk,bkd->bqd"}> : () -> ()
    %cst_32 = arith.constant dense<0.000000e+00> : vector<1x8x8xf32>
    %47 = tpu.matmul %46, %32, %cst_32 {dimension_numbers = #tpu.dot_dimension_numbers<[2], [1], [1], [2], [0, 0, 0, 1, 1, 2], [0], [0]>} : vector<1x8x8xf32>, vector<1x8x8xf32>, vector<1x8x8xf32> -> vector<1x8x8xf32>
    "tpu.trace_stop"() : () -> ()
    %48 = vector.shape_cast %47 : vector<1x8x8xf32> to vector<8x8xf32>
    %49 = vector.extract_strided_slice %29 {offsets = [0, 0], sizes = [8, 32], strides = [1, 1]} : vector<32x32xf32> to vector<8x32xf32>
    %cst_33 = arith.constant dense<0.000000e+00> : vector<8x32xf32>
    %50 = tpu.matmul %48, %49, %cst_33 {dimension_numbers = #tpu.dot_dimension_numbers<[1], [0], [0], [1], [0, 0, 1, 1], [], []>} : vector<8x8xf32>, vector<8x32xf32>, vector<8x32xf32> -> vector<8x32xf32>
    %51 = vector.extract_strided_slice %21 {offsets = [0, 0, 8], sizes = [1, 8, 8], strides = [1, 1, 1]} : vector<1x8x32xf32> to vector<1x8x8xf32>
    %52 = vector.extract_strided_slice %22 {offsets = [0, 0, 8], sizes = [1, 8, 8], strides = [1, 1, 1]} : vector<1x8x32xf32> to vector<1x8x8xf32>
    %53 = vector.extract_strided_slice %23 {offsets = [0, 0, 8], sizes = [1, 8, 8], strides = [1, 1, 1]} : vector<1x8x32xf32> to vector<1x8x8xf32>
    "tpu.trace_start"() <{level = 10 : i32, message = "bqd,bkd->bqk"}> : () -> ()
    %cst_34 = arith.constant dense<0.000000e+00> : vector<1x8x8xf32>
    %54 = tpu.matmul %51, %52, %cst_34 {dimension_numbers = #tpu.dot_dimension_numbers<[2], [2], [1], [1], [0, 0, 0, 1, 1, 1], [0], [0]>} : vector<1x8x8xf32>, vector<1x8x8xf32>, vector<1x8x8xf32> -> vector<1x8x8xf32>
    %cst_35 = arith.constant -1.000000e+09 : f32
    "tpu.trace_stop"() : () -> ()
    %55 = vector.shape_cast %28 : vector<1x1x8xi1> to vector<1x1x8xi1>
    %56 = vector.broadcast %55 : vector<1x1x8xi1> to vector<1x8x8xi1>
    %57 = vector.broadcast %cst_35 : f32 to vector<1x8x8xf32>
    %58 = arith.select %56, %57, %54 : vector<1x8x8xi1>, vector<1x8x8xf32>
    %cst_36 = arith.constant dense<0xFF800000> : vector<1x8xf32>
    %59 = vector.multi_reduction <maximumf>, %58, %cst_36 [2] : vector<1x8x8xf32> to vector<1x8xf32>
    %60 = vector.shape_cast %59 : vector<1x8xf32> to vector<1x8x1xf32>
    %61 = vector.broadcast %60 : vector<1x8x1xf32> to vector<1x8x8xf32>
    %62 = arith.subf %58, %61 : vector<1x8x8xf32>
    %63 = math.exp %62 : vector<1x8x8xf32>
    %cst_37 = arith.constant dense<0.000000e+00> : vector<1x8xf32>
    %64 = vector.multi_reduction <add>, %63, %cst_37 [2] : vector<1x8x8xf32> to vector<1x8xf32>
    %65 = vector.shape_cast %64 : vector<1x8xf32> to vector<1x8x1xf32>
    %66 = vector.broadcast %65 : vector<1x8x1xf32> to vector<1x8x8xf32>
    %67 = arith.divf %63, %66 : vector<1x8x8xf32>
    "tpu.trace_start"() <{level = 10 : i32, message = "bqk,bkd->bqd"}> : () -> ()
    %cst_38 = arith.constant dense<0.000000e+00> : vector<1x8x8xf32>
    %68 = tpu.matmul %67, %53, %cst_38 {dimension_numbers = #tpu.dot_dimension_numbers<[2], [1], [1], [2], [0, 0, 0, 1, 1, 2], [0], [0]>} : vector<1x8x8xf32>, vector<1x8x8xf32>, vector<1x8x8xf32> -> vector<1x8x8xf32>
    "tpu.trace_stop"() : () -> ()
    %69 = vector.shape_cast %68 : vector<1x8x8xf32> to vector<8x8xf32>
    %70 = vector.extract_strided_slice %29 {offsets = [8, 0], sizes = [8, 32], strides = [1, 1]} : vector<32x32xf32> to vector<8x32xf32>
    %cst_39 = arith.constant dense<0.000000e+00> : vector<8x32xf32>
    %71 = tpu.matmul %69, %70, %cst_39 {dimension_numbers = #tpu.dot_dimension_numbers<[1], [0], [0], [1], [0, 0, 1, 1], [], []>} : vector<8x8xf32>, vector<8x32xf32>, vector<8x32xf32> -> vector<8x32xf32>
    %72 = arith.addf %50, %71 : vector<8x32xf32>
    %73 = vector.extract_strided_slice %21 {offsets = [0, 0, 16], sizes = [1, 8, 8], strides = [1, 1, 1]} : vector<1x8x32xf32> to vector<1x8x8xf32>
    %74 = vector.extract_strided_slice %22 {offsets = [0, 0, 16], sizes = [1, 8, 8], strides = [1, 1, 1]} : vector<1x8x32xf32> to vector<1x8x8xf32>
    %75 = vector.extract_strided_slice %23 {offsets = [0, 0, 16], sizes = [1, 8, 8], strides = [1, 1, 1]} : vector<1x8x32xf32> to vector<1x8x8xf32>
    "tpu.trace_start"() <{level = 10 : i32, message = "bqd,bkd->bqk"}> : () -> ()
    %cst_40 = arith.constant dense<0.000000e+00> : vector<1x8x8xf32>
    %76 = tpu.matmul %73, %74, %cst_40 {dimension_numbers = #tpu.dot_dimension_numbers<[2], [2], [1], [1], [0, 0, 0, 1, 1, 1], [0], [0]>} : vector<1x8x8xf32>, vector<1x8x8xf32>, vector<1x8x8xf32> -> vector<1x8x8xf32>
    %cst_41 = arith.constant -1.000000e+09 : f32
    "tpu.trace_stop"() : () -> ()
    %77 = vector.shape_cast %28 : vector<1x1x8xi1> to vector<1x1x8xi1>
    %78 = vector.broadcast %77 : vector<1x1x8xi1> to vector<1x8x8xi1>
    %79 = vector.broadcast %cst_41 : f32 to vector<1x8x8xf32>
    %80 = arith.select %78, %79, %76 : vector<1x8x8xi1>, vector<1x8x8xf32>
    %cst_42 = arith.constant dense<0xFF800000> : vector<1x8xf32>
    %81 = vector.multi_reduction <maximumf>, %80, %cst_42 [2] : vector<1x8x8xf32> to vector<1x8xf32>
    %82 = vector.shape_cast %81 : vector<1x8xf32> to vector<1x8x1xf32>
    %83 = vector.broadcast %82 : vector<1x8x1xf32> to vector<1x8x8xf32>
    %84 = arith.subf %80, %83 : vector<1x8x8xf32>
    %85 = math.exp %84 : vector<1x8x8xf32>
    %cst_43 = arith.constant dense<0.000000e+00> : vector<1x8xf32>
    %86 = vector.multi_reduction <add>, %85, %cst_43 [2] : vector<1x8x8xf32> to vector<1x8xf32>
    %87 = vector.shape_cast %86 : vector<1x8xf32> to vector<1x8x1xf32>
    %88 = vector.broadcast %87 : vector<1x8x1xf32> to vector<1x8x8xf32>
    %89 = arith.divf %85, %88 : vector<1x8x8xf32>
    "tpu.trace_start"() <{level = 10 : i32, message = "bqk,bkd->bqd"}> : () -> ()
    %cst_44 = arith.constant dense<0.000000e+00> : vector<1x8x8xf32>
    %90 = tpu.matmul %89, %75, %cst_44 {dimension_numbers = #tpu.dot_dimension_numbers<[2], [1], [1], [2], [0, 0, 0, 1, 1, 2], [0], [0]>} : vector<1x8x8xf32>, vector<1x8x8xf32>, vector<1x8x8xf32> -> vector<1x8x8xf32>
    "tpu.trace_stop"() : () -> ()
    %91 = vector.shape_cast %90 : vector<1x8x8xf32> to vector<8x8xf32>
    %92 = vector.extract_strided_slice %29 {offsets = [16, 0], sizes = [8, 32], strides = [1, 1]} : vector<32x32xf32> to vector<8x32xf32>
    %cst_45 = arith.constant dense<0.000000e+00> : vector<8x32xf32>
    %93 = tpu.matmul %91, %92, %cst_45 {dimension_numbers = #tpu.dot_dimension_numbers<[1], [0], [0], [1], [0, 0, 1, 1], [], []>} : vector<8x8xf32>, vector<8x32xf32>, vector<8x32xf32> -> vector<8x32xf32>
    %94 = arith.addf %72, %93 : vector<8x32xf32>
    %95 = vector.extract_strided_slice %21 {offsets = [0, 0, 24], sizes = [1, 8, 8], strides = [1, 1, 1]} : vector<1x8x32xf32> to vector<1x8x8xf32>
    %96 = vector.extract_strided_slice %22 {offsets = [0, 0, 24], sizes = [1, 8, 8], strides = [1, 1, 1]} : vector<1x8x32xf32> to vector<1x8x8xf32>
    %97 = vector.extract_strided_slice %23 {offsets = [0, 0, 24], sizes = [1, 8, 8], strides = [1, 1, 1]} : vector<1x8x32xf32> to vector<1x8x8xf32>
    "tpu.trace_start"() <{level = 10 : i32, message = "bqd,bkd->bqk"}> : () -> ()
    %cst_46 = arith.constant dense<0.000000e+00> : vector<1x8x8xf32>
    %98 = tpu.matmul %95, %96, %cst_46 {dimension_numbers = #tpu.dot_dimension_numbers<[2], [2], [1], [1], [0, 0, 0, 1, 1, 1], [0], [0]>} : vector<1x8x8xf32>, vector<1x8x8xf32>, vector<1x8x8xf32> -> vector<1x8x8xf32>
    %cst_47 = arith.constant -1.000000e+09 : f32
    "tpu.trace_stop"() : () -> ()
    %99 = vector.shape_cast %28 : vector<1x1x8xi1> to vector<1x1x8xi1>
    %100 = vector.broadcast %99 : vector<1x1x8xi1> to vector<1x8x8xi1>
    %101 = vector.broadcast %cst_47 : f32 to vector<1x8x8xf32>
    %102 = arith.select %100, %101, %98 : vector<1x8x8xi1>, vector<1x8x8xf32>
    %cst_48 = arith.constant dense<0xFF800000> : vector<1x8xf32>
    %103 = vector.multi_reduction <maximumf>, %102, %cst_48 [2] : vector<1x8x8xf32> to vector<1x8xf32>
    %104 = vector.shape_cast %103 : vector<1x8xf32> to vector<1x8x1xf32>
    %105 = vector.broadcast %104 : vector<1x8x1xf32> to vector<1x8x8xf32>
    %106 = arith.subf %102, %105 : vector<1x8x8xf32>
    %107 = math.exp %106 : vector<1x8x8xf32>
    %cst_49 = arith.constant dense<0.000000e+00> : vector<1x8xf32>
    %108 = vector.multi_reduction <add>, %107, %cst_49 [2] : vector<1x8x8xf32> to vector<1x8xf32>
    %109 = vector.shape_cast %108 : vector<1x8xf32> to vector<1x8x1xf32>
    %110 = vector.broadcast %109 : vector<1x8x1xf32> to vector<1x8x8xf32>
    %111 = arith.divf %107, %110 : vector<1x8x8xf32>
    "tpu.trace_start"() <{level = 10 : i32, message = "bqk,bkd->bqd"}> : () -> ()
    %cst_50 = arith.constant dense<0.000000e+00> : vector<1x8x8xf32>
    %112 = tpu.matmul %111, %97, %cst_50 {dimension_numbers = #tpu.dot_dimension_numbers<[2], [1], [1], [2], [0, 0, 0, 1, 1, 2], [0], [0]>} : vector<1x8x8xf32>, vector<1x8x8xf32>, vector<1x8x8xf32> -> vector<1x8x8xf32>
    "tpu.trace_stop"() : () -> ()
    %113 = vector.shape_cast %112 : vector<1x8x8xf32> to vector<8x8xf32>
    %114 = vector.extract_strided_slice %29 {offsets = [24, 0], sizes = [8, 32], strides = [1, 1]} : vector<32x32xf32> to vector<8x32xf32>
    %cst_51 = arith.constant dense<0.000000e+00> : vector<8x32xf32>
    %115 = tpu.matmul %113, %114, %cst_51 {dimension_numbers = #tpu.dot_dimension_numbers<[1], [0], [0], [1], [0, 0, 1, 1], [], []>} : vector<8x8xf32>, vector<8x32xf32>, vector<8x32xf32> -> vector<8x32xf32>
    %116 = arith.addf %94, %115 : vector<8x32xf32>
    %c0_52 = arith.constant 0 : index
    %c0_53 = arith.constant 0 : index
    %117 = vector.load %arg12[%c0_52, %c0_53] : memref<1x32xf32, #tpu.memory_space<vmem>>, vector<1x32xf32>
    %118 = vector.broadcast %117 : vector<1x32xf32> to vector<8x32xf32>
    %119 = arith.addf %116, %118 : vector<8x32xf32>
    %120 = vector.shape_cast %119 : vector<8x32xf32> to vector<1x8x32xf32>
    %c0_54 = arith.constant 0 : index
    %c0_55 = arith.constant 0 : index
    %c0_56 = arith.constant 0 : index
    %121 = vector.load %arg13[%c0_54, %c0_55, %c0_56] : memref<1x8x32xf32, #tpu.memory_space<vmem>>, vector<1x8x32xf32>
    tpu.vector_store %arg13[%c0_54, %c0_55, %c0_56], %120 {strides = array<i32>} : memref<1x8x32xf32, #tpu.memory_space<vmem>>, vector<1x8x32xf32>,
    return
  }
  func.func @transform_0(%arg0: i32) -> (i32, i32, i32) {
    %c0_i32 = arith.constant 0 : i32
    %c0_i32_0 = arith.constant 0 : i32
    %c0_i32_1 = arith.constant 0 : i32
    return %arg0, %c0_i32, %c0_i32_0 : i32, i32, i32
  }
  func.func @transform_1(%arg0: i32) -> (i32, i32, i32) {
    %c0_i32 = arith.constant 0 : i32
    %c0_i32_0 = arith.constant 0 : i32
    %c0_i32_1 = arith.constant 0 : i32
    return %arg0, %c0_i32, %c0_i32_0 : i32, i32, i32
  }
  func.func @transform_2(%arg0: i32) -> (i32, i32, i32) {
    %c0_i32 = arith.constant 0 : i32
    %c0_i32_0 = arith.constant 0 : i32
    %c0_i32_1 = arith.constant 0 : i32
    return %arg0, %c0_i32, %c0_i32_0 : i32, i32, i32
  }
  func.func @transform_3(%arg0: i32) -> (i32, i32, i32) {
    %c0_i32 = arith.constant 0 : i32
    %c0_i32_0 = arith.constant 0 : i32
    %c0_i32_1 = arith.constant 0 : i32
    return %arg0, %c0_i32, %c0_i32_0 : i32, i32, i32
  }
  func.func @transform_4(%arg0: i32) -> (i32, i32) {
    %c0_i32 = arith.constant 0 : i32
    %c0_i32_0 = arith.constant 0 : i32
    %c0_i32_1 = arith.constant 0 : i32
    return %c0_i32, %c0_i32_0 : i32, i32
  }
  func.func @transform_5(%arg0: i32) -> (i32, i32) {
    %c0_i32 = arith.constant 0 : i32
    %c0_i32_0 = arith.constant 0 : i32
    %c0_i32_1 = arith.constant 0 : i32
    return %c0_i32, %c0_i32_0 : i32, i32
  }
  func.func @transform_6(%arg0: i32) -> (i32, i32) {
    %c0_i32 = arith.constant 0 : i32
    %c0_i32_0 = arith.constant 0 : i32
    %c0_i32_1 = arith.constant 0 : i32
    return %c0_i32, %c0_i32_0 : i32, i32
  }
  func.func @transform_7(%arg0: i32) -> (i32, i32) {
    %c0_i32 = arith.constant 0 : i32
    %c0_i32_0 = arith.constant 0 : i32
    %c0_i32_1 = arith.constant 0 : i32
    return %c0_i32, %c0_i32_0 : i32, i32
  }
  func.func @transform_8(%arg0: i32) -> (i32, i32) {
    %c0_i32 = arith.constant 0 : i32
    %c0_i32_0 = arith.constant 0 : i32
    %c0_i32_1 = arith.constant 0 : i32
    return %c0_i32, %c0_i32_0 : i32, i32
  }
  func.func @transform_9(%arg0: i32) -> (i32, i32) {
    %c0_i32 = arith.constant 0 : i32
    %c0_i32_0 = arith.constant 0 : i32
    %c0_i32_1 = arith.constant 0 : i32
    return %c0_i32, %c0_i32_0 : i32, i32
  }
  func.func @transform_10(%arg0: i32) -> (i32, i32) {
    %c0_i32 = arith.constant 0 : i32
    %c0_i32_0 = arith.constant 0 : i32
    %c0_i32_1 = arith.constant 0 : i32
    return %c0_i32, %c0_i32_0 : i32, i32
  }
  func.func @transform_11(%arg0: i32) -> (i32, i32) {
    %c0_i32 = arith.constant 0 : i32
    %c0_i32_0 = arith.constant 0 : i32
    %c0_i32_1 = arith.constant 0 : i32
    return %c0_i32, %c0_i32_0 : i32, i32
  }
  func.func @transform_12(%arg0: i32) -> (i32, i32, i32) {
    %c0_i32 = arith.constant 0 : i32
    %c0_i32_0 = arith.constant 0 : i32
    %c0_i32_1 = arith.constant 0 : i32
    return %arg0, %c0_i32, %c0_i32_0 : i32, i32, i32
  }
}

</mosaic_0001>

<llo_original>
// kernel: tpu_custom_call.1
$region0: #{tpu_custom_call.1}
  #allocation0 [shape = 'u32[]', space=smem, size = 0x4, offset = 0x4, fixed_abs, tag = 'smem constant byte address 0x4 - core index']
  #allocation1 [shape = 'u32[72,128]{1,0:T(1,128)}', space=vmem, size = 0x9000, scoped, tag = 'internal scratch']
  %s0 = inlined_call_operand.hbm [shape: f32[2,8,32], index: 0, kind: input, shape index: {}]
  %s1 = inlined_call_operand.hbm [shape: f32[2,8,32], index: 1, kind: input, shape index: {}]
  %s2 = inlined_call_operand.hbm [shape: f32[2,8,32], index: 2, kind: input, shape index: {}]
  %s3 = inlined_call_operand.vmem [shape: f32[2,1,8], index: 3, kind: input, shape index: {}]
  %s4 = inlined_call_operand.hbm [shape: f32[32,32], index: 4, kind: input, shape index: {}]
  %s5 = inlined_call_operand.vmem [shape: f32[1,32], index: 5, kind: input, shape index: {}]
  %s6 = inlined_call_operand.hbm [shape: f32[32,32], index: 6, kind: input, shape index: {}]
  %s7 = inlined_call_operand.vmem [shape: f32[1,32], index: 7, kind: input, shape index: {}]
  %s8 = inlined_call_operand.hbm [shape: f32[32,32], index: 8, kind: input, shape index: {}]
  %s9 = inlined_call_operand.vmem [shape: f32[1,32], index: 9, kind: input, shape index: {}]
  %s10 = inlined_call_operand.hbm [shape: f32[32,32], index: 10, kind: input, shape index: {}]
  %s11 = inlined_call_operand.vmem [shape: f32[1,32], index: 11, kind: input, shape index: {}]
  %s12 = inlined_call_operand.hbm [shape: f32[2,8,32], index: 12, kind: output, shape index: {}]
  %s13 = sld [smem:[#allocation0]]
  $region109: #{tpu_custom_call.1} parent=0
    _
  %s15 = ssub.s32 1, %s13
  %s16 = scalar_select 0, %s15, %s13
  $region1: #{tpu_custom_call.1} parent=0
    #allocation2 [shape = 'u8[8192]{0}', space=vmem, size = 0x2000, scoped, tag = 'input window, operand 0']
    #allocation3 [shape = 's32[2]{0}', space=sflag, size = 0x8, scoped, tag = 'scoped memory for tpu_custom_call.1']
    #allocation4 [shape = 's32[2]{0}', space=sflag, size = 0x8, scoped, tag = 'scoped memory for tpu_custom_call.1']
    #allocation5 [shape = 'u8[8192]{0}', space=vmem, size = 0x2000, scoped, tag = 'input window, operand 1']
    #allocation6 [shape = 's32[2]{0}', space=sflag, size = 0x8, scoped, tag = 'scoped memory for tpu_custom_call.1']
    #allocation7 [shape = 'u8[8192]{0}', space=vmem, size = 0x2000, scoped, tag = 'input window, operand 2']
    #allocation8 [shape = 'u8[16384]{0}', space=vmem, size = 0x4000, scoped, tag = 'input window, operand 4, single buffered']
    #allocation9 [shape = 's32[1]{0}', space=sflag, size = 0x4, scoped, tag = 'scoped memory for tpu_custom_call.1']
    #allocation10 [shape = 'u8[16384]{0}', space=vmem, size = 0x4000, scoped, tag = 'input window, operand 6, single buffered']
    #allocation11 [shape = 'u8[16384]{0}', space=vmem, size = 0x4000, scoped, tag = 'input window, operand 8, single buffered']
    #allocation12 [shape = 's32[1]{0}', space=sflag, size = 0x4, scoped, tag = 'scoped memory for tpu_custom_call.1']
    #allocation13 [shape = 'u8[16384]{0}', space=vmem, size = 0x4000, scoped, tag = 'input window, operand 10, single buffered']
    #allocation14 [shape = 'u8[8192]{0}', space=vmem, size = 0x2000, scoped, tag = 'output window, operand 0']
    %17 = vsyncpa [#allocation3], 0
    %s18 = scalar_lea.sflag [#allocation3], 1
    %19 = vsyncpa %s18, 0
    %20 = vsyncpa [#allocation6], 0
    %s21 = scalar_lea.sflag [#allocation6], 1
    %22 = vsyncpa %s21, 0
    %23 = vsyncpa [#allocation9], 0
    %24 = vsyncpa [#allocation12], 0
    %25 = vsyncpa [#allocation4], 0
    %s26 = scalar_lea.sflag [#allocation4], 1
    %27 = vsyncpa %s26, 0
    loop: start=0, step=1, limit=4
    $region2: #{tpu_custom_call.1} parent=1 // loop_pre_header
      _
    $region3: #{tpu_custom_call.1} parent=1 // loop_header
      %s29 = sphi 0, %s33
      %p30 = scmp.ge.s32.totalorder %s29, 4
      %s39 = sphi 0, %s41
      %s42 = sphi 0, %s39
      %s43 = sphi 0, %s42
      %s59 = sphi 0, %s43
      %s65 = sphi 0, %s67
      %s68 = sphi 0, %s65
      %s69 = sphi 0, %s68
      %s85 = sphi 0, %s69
      %s91 = sphi 0, %s93
      %s94 = sphi 0, %s91
      %s95 = sphi 0, %s94
      %s111 = sphi 0, %s95
      %s117 = sphi 0, %s119
      %s120 = sphi 0, %s117
      %s121 = sphi 0, %s120
      %s137 = sphi 0, %s121
      %s141 = sphi 0, %s141
      %s143 = sphi 0, %s141
      %s144 = sphi 0, %s143
      %s158 = sphi 0, %s144
      %s162 = sphi 0, %s162
      %s164 = sphi 0, %s162
      %s165 = sphi 0, %s164
      %s179 = sphi 0, %s165
      %s183 = sphi 0, %s183
      %s185 = sphi 0, %s183
      %s186 = sphi 0, %s185
      %s200 = sphi 0, %s186
      %s204 = sphi 0, %s204
      %s206 = sphi 0, %s204
      %s207 = sphi 0, %s206
      %s221 = sphi 0, %s207
      %s225 = sphi 0, %s225
      %s227 = sphi 0, %s225
      %s228 = sphi 0, %s227
      %s242 = sphi 0, %s228
      %s246 = sphi 0, %s246
      %s248 = sphi 0, %s246
      %s249 = sphi 0, %s248
      %s263 = sphi 0, %s249
      %s267 = sphi 0, %s267
      %s269 = sphi 0, %s267
      %s270 = sphi 0, %s269
      %s284 = sphi 0, %s270
      %s288 = sphi 0, %s288
      %s290 = sphi 0, %s288
      %s291 = sphi 0, %s290
      %s305 = sphi 0, %s291
      %s311 = sphi 0, %s313
      %s314 = sphi 0, %s311
      %s315 = sphi 0, %s314
      %s331 = sphi 0, %s315
    $region4: #{tpu_custom_call.1} parent=1 // loop_header_branch
      %32 = sbr.rel (%p30) target = $region8
    $region5: #{tpu_custom_call.1} parent=1 // loop_body
      %s34 = ssub.s32 %s29, 1
      %s35 = ssub.s32 %s29, 2
      %s36 = sadd.s32 %s29, 1
      %s37 = ssub.s32 %s29, %s36
      %p38 = scmp.eq.s32.totalorder %s37, 0
      %s40 = sadd.s32 %s39, 1
      %s41 = scalar_select %p38, %s39, %s40
      %p44 = pneg %p38
      %p45 = scmp.eq.s32.totalorder %s29, 1
      %p46 = por %p44, %p45
      %p47 = scmp.ne.s32.totalorder %s39, %s42
      %p48 = scmp.eq.s32.totalorder %s29, 0
      %p49 = por %p47, %p48
      %p50 = scmp.ne.s32.totalorder %s39, %s42
      %p51 = scmp.eq.s32.totalorder %s34, 1
      %p52 = por %p50, %p51
      %p53 = scmp.ne.s32.totalorder %s42, %s43
      %p54 = scmp.eq.s32.totalorder %s34, 0
      %p55 = por %p53, %p54
      %p56 = scmp.ne.s32.totalorder %s42, %s43
      %p57 = scmp.eq.s32.totalorder %s35, 1
      %p58 = por %p56, %p57
      %p60 = scmp.ne.s32.totalorder %s43, %s59
      %p61 = scmp.eq.s32.totalorder %s35, 0
      %p62 = por %p60, %p61
      %s63 = ssub.s32 %s29, %s36
      %p64 = scmp.eq.s32.totalorder %s63, 0
      %s66 = sadd.s32 %s65, 1
      %s67 = scalar_select %p64, %s65, %s66
      %p70 = pneg %p64
      %p71 = scmp.eq.s32.totalorder %s29, 1
      %p72 = por %p70, %p71
      %p73 = scmp.ne.s32.totalorder %s65, %s68
      %p74 = scmp.eq.s32.totalorder %s29, 0
      %p75 = por %p73, %p74
      %p76 = scmp.ne.s32.totalorder %s65, %s68
      %p77 = scmp.eq.s32.totalorder %s34, 1
      %p78 = por %p76, %p77
      %p79 = scmp.ne.s32.totalorder %s68, %s69
      %p80 = scmp.eq.s32.totalorder %s34, 0
      %p81 = por %p79, %p80
      %p82 = scmp.ne.s32.totalorder %s68, %s69
      %p83 = scmp.eq.s32.totalorder %s35, 1
      %p84 = por %p82, %p83
      %p86 = scmp.ne.s32.totalorder %s69, %s85
      %p87 = scmp.eq.s32.totalorder %s35, 0
      %p88 = por %p86, %p87
      %s89 = ssub.s32 %s29, %s36
      %p90 = scmp.eq.s32.totalorder %s89, 0
      %s92 = sadd.s32 %s91, 1
      %s93 = scalar_select %p90, %s91, %s92
      %p96 = pneg %p90
      %p97 = scmp.eq.s32.totalorder %s29, 1
      %p98 = por %p96, %p97
      %p99 = scmp.ne.s32.totalorder %s91, %s94
      %p100 = scmp.eq.s32.totalorder %s29, 0
      %p101 = por %p99, %p100
      %p102 = scmp.ne.s32.totalorder %s91, %s94
      %p103 = scmp.eq.s32.totalorder %s34, 1
      %p104 = por %p102, %p103
      %p105 = scmp.ne.s32.totalorder %s94, %s95
      %p106 = scmp.eq.s32.totalorder %s34, 0
      %p107 = por %p105, %p106
      %p108 = scmp.ne.s32.totalorder %s94, %s95
      %p109 = scmp.eq.s32.totalorder %s35, 1
      %p110 = por %p108, %p109
      %p112 = scmp.ne.s32.totalorder %s95, %s111
      %p113 = scmp.eq.s32.totalorder %s35, 0
      %p114 = por %p112, %p113
      %s115 = ssub.s32 %s29, %s36
      %p116 = scmp.eq.s32.totalorder %s115, 0
      %s118 = sadd.s32 %s117, 1
      %s119 = scalar_select %p116, %s117, %s118
      %p122 = pneg %p116
      %p123 = scmp.eq.s32.totalorder %s29, 1
      %p124 = por %p122, %p123
      %p125 = scmp.ne.s32.totalorder %s117, %s120
      %p126 = scmp.eq.s32.totalorder %s29, 0
      %p127 = por %p125, %p126
      %p128 = scmp.ne.s32.totalorder %s117, %s120
      %p129 = scmp.eq.s32.totalorder %s34, 1
      %p130 = por %p128, %p129
      %p131 = scmp.ne.s32.totalorder %s120, %s121
      %p132 = scmp.eq.s32.totalorder %s34, 0
      %p133 = por %p131, %p132
      %p134 = scmp.ne.s32.totalorder %s120, %s121
      %p135 = scmp.eq.s32.totalorder %s35, 1
      %p136 = por %p134, %p135
      %p138 = scmp.ne.s32.totalorder %s121, %s137
      %p139 = scmp.eq.s32.totalorder %s35, 0
      %p140 = por %p138, %p139
      %s142 = sadd.s32 %s141, 1
      %p145 = scmp.eq.s32.totalorder %s29, 1
      %p146 = scmp.ne.s32.totalorder %s141, %s143
      %p147 = scmp.eq.s32.totalorder %s29, 0
      %p148 = por %p146, %p147
      %p149 = scmp.ne.s32.totalorder %s141, %s143
      %p150 = scmp.eq.s32.totalorder %s34, 1
      %p151 = por %p149, %p150
      %p152 = scmp.ne.s32.totalorder %s143, %s144
      %p153 = scmp.eq.s32.totalorder %s34, 0
      %p154 = por %p152, %p153
      %p155 = scmp.ne.s32.totalorder %s143, %s144
      %p156 = scmp.eq.s32.totalorder %s35, 1
      %p157 = por %p155, %p156
      %p159 = scmp.ne.s32.totalorder %s144, %s158
      %p160 = scmp.eq.s32.totalorder %s35, 0
      %p161 = por %p159, %p160
      %s163 = sadd.s32 %s162, 1
      %p166 = scmp.eq.s32.totalorder %s29, 1
      %p167 = scmp.ne.s32.totalorder %s162, %s164
      %p168 = scmp.eq.s32.totalorder %s29, 0
      %p169 = por %p167, %p168
      %p170 = scmp.ne.s32.totalorder %s162, %s164
      %p171 = scmp.eq.s32.totalorder %s34, 1
      %p172 = por %p170, %p171
      %p173 = scmp.ne.s32.totalorder %s164, %s165
      %p174 = scmp.eq.s32.totalorder %s34, 0
      %p175 = por %p173, %p174
      %p176 = scmp.ne.s32.totalorder %s164, %s165
      %p177 = scmp.eq.s32.totalorder %s35, 1
      %p178 = por %p176, %p177
      %p180 = scmp.ne.s32.totalorder %s165, %s179
      %p181 = scmp.eq.s32.totalorder %s35, 0
      %p182 = por %p180, %p181
      %s184 = sadd.s32 %s183, 1
      %p187 = scmp.eq.s32.totalorder %s29, 1
      %p188 = scmp.ne.s32.totalorder %s183, %s185
      %p189 = scmp.eq.s32.totalorder %s29, 0
      %p190 = por %p188, %p189
      %p191 = scmp.ne.s32.totalorder %s183, %s185
      %p192 = scmp.eq.s32.totalorder %s34, 1
      %p193 = por %p191, %p192
      %p194 = scmp.ne.s32.totalorder %s185, %s186
      %p195 = scmp.eq.s32.totalorder %s34, 0
      %p196 = por %p194, %p195
      %p197 = scmp.ne.s32.totalorder %s185, %s186
      %p198 = scmp.eq.s32.totalorder %s35, 1
      %p199 = por %p197, %p198
      %p201 = scmp.ne.s32.totalorder %s186, %s200
      %p202 = scmp.eq.s32.totalorder %s35, 0
      %p203 = por %p201, %p202
      %s205 = sadd.s32 %s204, 1
      %p208 = scmp.eq.s32.totalorder %s29, 1
      %p209 = scmp.ne.s32.totalorder %s204, %s206
      %p210 = scmp.eq.s32.totalorder %s29, 0
      %p211 = por %p209, %p210
      %p212 = scmp.ne.s32.totalorder %s204, %s206
      %p213 = scmp.eq.s32.totalorder %s34, 1
      %p214 = por %p212, %p213
      %p215 = scmp.ne.s32.totalorder %s206, %s207
      %p216 = scmp.eq.s32.totalorder %s34, 0
      %p217 = por %p215, %p216
      %p218 = scmp.ne.s32.totalorder %s206, %s207
      %p219 = scmp.eq.s32.totalorder %s35, 1
      %p220 = por %p218, %p219
      %p222 = scmp.ne.s32.totalorder %s207, %s221
      %p223 = scmp.eq.s32.totalorder %s35, 0
      %p224 = por %p222, %p223
      %s226 = sadd.s32 %s225, 1
      %p229 = scmp.eq.s32.totalorder %s29, 1
      %p230 = scmp.ne.s32.totalorder %s225, %s227
      %p231 = scmp.eq.s32.totalorder %s29, 0
      %p232 = por %p230, %p231
      %p233 = scmp.ne.s32.totalorder %s225, %s227
      %p234 = scmp.eq.s32.totalorder %s34, 1
      %p235 = por %p233, %p234
      %p236 = scmp.ne.s32.totalorder %s227, %s228
      %p237 = scmp.eq.s32.totalorder %s34, 0
      %p238 = por %p236, %p237
      %p239 = scmp.ne.s32.totalorder %s227, %s228
      %p240 = scmp.eq.s32.totalorder %s35, 1
      %p241 = por %p239, %p240
      %p243 = scmp.ne.s32.totalorder %s228, %s242
      %p244 = scmp.eq.s32.totalorder %s35, 0
      %p245 = por %p243, %p244
      %s247 = sadd.s32 %s246, 1
      %p250 = scmp.eq.s32.totalorder %s29, 1
      %p251 = scmp.ne.s32.totalorder %s246, %s248
      %p252 = scmp.eq.s32.totalorder %s29, 0
      %p253 = por %p251, %p252
      %p254 = scmp.ne.s32.totalorder %s246, %s248
      %p255 = scmp.eq.s32.totalorder %s34, 1
      %p256 = por %p254, %p255
      %p257 = scmp.ne.s32.totalorder %s248, %s249
      %p258 = scmp.eq.s32.totalorder %s34, 0
      %p259 = por %p257, %p258
      %p260 = scmp.ne.s32.totalorder %s248, %s249
      %p261 = scmp.eq.s32.totalorder %s35, 1
      %p262 = por %p260, %p261
      %p264 = scmp.ne.s32.totalorder %s249, %s263
      %p265 = scmp.eq.s32.totalorder %s35, 0
      %p266 = por %p264, %p265
      %s268 = sadd.s32 %s267, 1
      %p271 = scmp.eq.s32.totalorder %s29, 1
      %p272 = scmp.ne.s32.totalorder %s267, %s269
      %p273 = scmp.eq.s32.totalorder %s29, 0
      %p274 = por %p272, %p273
      %p275 = scmp.ne.s32.totalorder %s267, %s269
      %p276 = scmp.eq.s32.totalorder %s34, 1
      %p277 = por %p275, %p276
      %p278 = scmp.ne.s32.totalorder %s269, %s270
      %p279 = scmp.eq.s32.totalorder %s34, 0
      %p280 = por %p278, %p279
      %p281 = scmp.ne.s32.totalorder %s269, %s270
      %p282 = scmp.eq.s32.totalorder %s35, 1
      %p283 = por %p281, %p282
      %p285 = scmp.ne.s32.totalorder %s270, %s284
      %p286 = scmp.eq.s32.totalorder %s35, 0
      %p287 = por %p285, %p286
      %s289 = sadd.s32 %s288, 1
      %p292 = scmp.eq.s32.totalorder %s29, 1
      %p293 = scmp.ne.s32.totalorder %s288, %s290
      %p294 = scmp.eq.s32.totalorder %s29, 0
      %p295 = por %p293, %p294
      %p296 = scmp.ne.s32.totalorder %s288, %s290
      %p297 = scmp.eq.s32.totalorder %s34, 1
      %p298 = por %p296, %p297
      %p299 = scmp.ne.s32.totalorder %s290, %s291
      %p300 = scmp.eq.s32.totalorder %s34, 0
      %p301 = por %p299, %p300
      %p302 = scmp.ne.s32.totalorder %s290, %s291
      %p303 = scmp.eq.s32.totalorder %s35, 1
      %p304 = por %p302, %p303
      %p306 = scmp.ne.s32.totalorder %s291, %s305
      %p307 = scmp.eq.s32.totalorder %s35, 0
      %p308 = por %p306, %p307
      %s309 = ssub.s32 %s29, %s36
      %p310 = scmp.eq.s32.totalorder %s309, 0
      %s312 = sadd.s32 %s311, 1
      %s313 = scalar_select %p310, %s311, %s312
      %p316 = pneg %p310
      %p317 = scmp.eq.s32.totalorder %s29, 1
      %p318 = por %p316, %p317
      %p319 = scmp.ne.s32.totalorder %s311, %s314
      %p320 = scmp.eq.s32.totalorder %s29, 0
      %p321 = por %p319, %p320
      %p322 = scmp.ne.s32.totalorder %s311, %s314
      %p323 = scmp.eq.s32.totalorder %s34, 1
      %p324 = por %p322, %p323
      %p325 = scmp.ne.s32.totalorder %s314, %s315
      %p326 = scmp.eq.s32.totalorder %s34, 0
      %p327 = por %p325, %p326
      %p328 = scmp.ne.s32.totalorder %s314, %s315
      %p329 = scmp.eq.s32.totalorder %s35, 1
      %p330 = por %p328, %p329
      %p332 = scmp.ne.s32.totalorder %s315, %s331
      %p333 = scmp.eq.s32.totalorder %s35, 0
      %p334 = por %p332, %p333
      %p335 = scmp.le.s32.totalorder 1, %s29
      %p336 = scmp.lt.s32.totalorder %s29, 3
      %p337 = pnand %p335, %p336
      %p338 = pneg %p337
      // Predicated region
      $region9: #{tpu_custom_call.1} parent=5 // pred_check
        _
      $region10: #{tpu_custom_call.1} parent=5 // pred_check_branch
        %340 = sbr.rel (%p337) target = $region12
      $region11: #{tpu_custom_call.1} parent=5 // pred_region
        %s341 = ssub.s32 %s29, 1
        // Predicated region
        $region13: #{tpu_custom_call.1} parent=11 // pred_check
          %p342 = pneg %p154
        $region14: #{tpu_custom_call.1} parent=11 // pred_check_branch
          %344 = sbr.rel (%p342) target = $region16
        $region15: #{tpu_custom_call.1} parent=11 // pred_region
          %346 = vsyncadd [#allocation9], 0
          %s347 = sshll.u32 %s4, 4
          %s348 = int_to_ptr.hbm [resolvable:$true] %s347
          %s349 = sshll.u32 [#allocation8], 4
          %s350 = int_to_ptr.vmem [resolvable:$true] %s349
          %355 = dma.hbm_to_vmem [thread:$0]  %s348, 512, %s350, [#allocation9], 128, 128, 8
        $region16: #{tpu_custom_call.1} parent=11 // pred_fallthru
          _
        // Predicated region
        $region17: #{tpu_custom_call.1} parent=11 // pred_check
          %p356 = pneg %p175
        $region18: #{tpu_custom_call.1} parent=11 // pred_check_branch
          %358 = sbr.rel (%p356) target = $region20
        $region19: #{tpu_custom_call.1} parent=11 // pred_region
          _
        $region20: #{tpu_custom_call.1} parent=11 // pred_fallthru
          _
        // Predicated region
        $region21: #{tpu_custom_call.1} parent=11 // pred_check
          %p359 = pneg %p196
        $region22: #{tpu_custom_call.1} parent=11 // pred_check_branch
          %361 = sbr.rel (%p359) target = $region24
        $region23: #{tpu_custom_call.1} parent=11 // pred_region
          %363 = vsyncadd [#allocation9], 0
          %s364 = sshll.u32 %s6, 4
          %s365 = int_to_ptr.hbm [resolvable:$true] %s364
          %s366 = sshll.u32 [#allocation10], 4
          %s367 = int_to_ptr.vmem [resolvable:$true] %s366
          %372 = dma.hbm_to_vmem [thread:$0]  %s365, 512, %s367, [#allocation9], 128, 128, 8
        $region24: #{tpu_custom_call.1} parent=11 // pred_fallthru
          _
        // Predicated region
        $region25: #{tpu_custom_call.1} parent=11 // pred_check
          %p373 = pneg %p217
        $region26: #{tpu_custom_call.1} parent=11 // pred_check_branch
          %375 = sbr.rel (%p373) target = $region28
        $region27: #{tpu_custom_call.1} parent=11 // pred_region
          _
        $region28: #{tpu_custom_call.1} parent=11 // pred_fallthru
          _
        // Predicated region
        $region29: #{tpu_custom_call.1} parent=11 // pred_check
          %p376 = pneg %p238
        $region30: #{tpu_custom_call.1} parent=11 // pred_check_branch
          %378 = sbr.rel (%p376) target = $region32
        $region31: #{tpu_custom_call.1} parent=11 // pred_region
          %380 = vsyncadd [#allocation12], 0
          %s381 = sshll.u32 %s8, 4
          %s382 = int_to_ptr.hbm [resolvable:$true] %s381
          %s383 = sshll.u32 [#allocation11], 4
          %s384 = int_to_ptr.vmem [resolvable:$true] %s383
          %389 = dma.hbm_to_vmem [thread:$0]  %s382, 512, %s384, [#allocation12], 128, 128, 8
        $region32: #{tpu_custom_call.1} parent=11 // pred_fallthru
          _
        // Predicated region
        $region33: #{tpu_custom_call.1} parent=11 // pred_check
          %p390 = pneg %p259
        $region34: #{tpu_custom_call.1} parent=11 // pred_check_branch
          %392 = sbr.rel (%p390) target = $region36
        $region35: #{tpu_custom_call.1} parent=11 // pred_region
          _
        $region36: #{tpu_custom_call.1} parent=11 // pred_fallthru
          _
        // Predicated region
        $region37: #{tpu_custom_call.1} parent=11 // pred_check
          %p393 = pneg %p280
        $region38: #{tpu_custom_call.1} parent=11 // pred_check_branch
          %395 = sbr.rel (%p393) target = $region40
        $region39: #{tpu_custom_call.1} parent=11 // pred_region
          %397 = vsyncadd [#allocation12], 0
          %s398 = sshll.u32 %s10, 4
          %s399 = int_to_ptr.hbm [resolvable:$true] %s398
          %s400 = sshll.u32 [#allocation13], 4
          %s401 = int_to_ptr.vmem [resolvable:$true] %s400
          %406 = dma.hbm_to_vmem [thread:$0]  %s399, 512, %s401, [#allocation12], 128, 128, 8
        $region40: #{tpu_custom_call.1} parent=11 // pred_fallthru
          _
        // Predicated region
        $region41: #{tpu_custom_call.1} parent=11 // pred_check
          %p407 = pneg %p301
        $region42: #{tpu_custom_call.1} parent=11 // pred_check_branch
          %409 = sbr.rel (%p407) target = $region44
        $region43: #{tpu_custom_call.1} parent=11 // pred_region
          _
        $region44: #{tpu_custom_call.1} parent=11 // pred_fallthru
          _
      $region12: #{tpu_custom_call.1} parent=5 // pred_fallthru
        _
      %p410 = scmp.lt.s32.totalorder %s29, 2
      // Predicated region
      $region45: #{tpu_custom_call.1} parent=5 // pred_check
        %p411 = pneg %p410
      $region46: #{tpu_custom_call.1} parent=5 // pred_check_branch
        %413 = sbr.rel (%p411) target = $region48
      $region47: #{tpu_custom_call.1} parent=5 // pred_region
        // Predicated region
        $region49: #{tpu_custom_call.1} parent=47 // pred_check
          %p414 = pneg %p49
        $region50: #{tpu_custom_call.1} parent=47 // pred_check_branch
          %416 = sbr.rel (%p414) target = $region52
        $region51: #{tpu_custom_call.1} parent=47 // pred_region
          %s417 = sand.u32 %s39, 1
          %s418 = scalar_lea.sflag [#allocation3], %s417
          %s419 = sand.u32 %s39, 1
          %s420 = smul.addr %s419, 8
          %s421 = scalar_lea.vmem [#allocation2], %s420
          %423 = vsyncadd %s418, 0
          %s424 = smul.addr %s29, 8
          %s425 = scalar_lea.hbm %s0, %s424
          %s427 = sshll.u32 %s425, 4
          %s428 = int_to_ptr.hbm [resolvable:$true] %s427
          %s429 = sshll.u32 %s421, 4
          %s430 = int_to_ptr.vmem [resolvable:$true] %s429
          %432 = dma.hbm_to_vmem [thread:$0]  %s428, 128, %s430, %s418
        $region52: #{tpu_custom_call.1} parent=47 // pred_fallthru
          _
        // Predicated region
        $region53: #{tpu_custom_call.1} parent=47 // pred_check
          %p433 = pneg %p75
        $region54: #{tpu_custom_call.1} parent=47 // pred_check_branch
          %435 = sbr.rel (%p433) target = $region56
        $region55: #{tpu_custom_call.1} parent=47 // pred_region
          %s436 = sand.u32 %s29, 1
          %s437 = scalar_lea.sflag [#allocation6], %s436
          %s438 = sand.u32 %s65, 1
          %s439 = smul.addr %s438, 8
          %s440 = scalar_lea.vmem [#allocation5], %s439
          %442 = vsyncadd %s437, 0
          %s443 = smul.addr %s29, 8
          %s444 = scalar_lea.hbm %s1, %s443
          %s446 = sshll.u32 %s444, 4
          %s447 = int_to_ptr.hbm [resolvable:$true] %s446
          %s448 = sshll.u32 %s440, 4
          %s449 = int_to_ptr.vmem [resolvable:$true] %s448
          %451 = dma.hbm_to_vmem [thread:$0]  %s447, 128, %s449, %s437
        $region56: #{tpu_custom_call.1} parent=47 // pred_fallthru
          _
        // Predicated region
        $region57: #{tpu_custom_call.1} parent=47 // pred_check
          %p452 = pneg %p101
        $region58: #{tpu_custom_call.1} parent=47 // pred_check_branch
          %454 = sbr.rel (%p452) target = $region60
        $region59: #{tpu_custom_call.1} parent=47 // pred_region
          %s455 = sand.u32 %s29, 1
          %s456 = scalar_lea.sflag [#allocation6], %s455
          %s457 = sand.u32 %s91, 1
          %s458 = smul.addr %s457, 8
          %s459 = scalar_lea.vmem [#allocation7], %s458
          %461 = vsyncadd %s456, 0
          %s462 = smul.addr %s29, 8
          %s463 = scalar_lea.hbm %s2, %s462
          %s465 = sshll.u32 %s463, 4
          %s466 = int_to_ptr.hbm [resolvable:$true] %s465
          %s467 = sshll.u32 %s459, 4
          %s468 = int_to_ptr.vmem [resolvable:$true] %s467
          %470 = dma.hbm_to_vmem [thread:$0]  %s466, 128, %s468, %s456
        $region60: #{tpu_custom_call.1} parent=47 // pred_fallthru
          _
        // Predicated region
        $region61: #{tpu_custom_call.1} parent=47 // pred_check
          %p471 = pneg %p127
        $region62: #{tpu_custom_call.1} parent=47 // pred_check_branch
          %473 = sbr.rel (%p471) target = $region64
        $region63: #{tpu_custom_call.1} parent=47 // pred_region
          %p474 = scmp.lt.s32.totalorder %s29, 1
          %s475 = scalar_select %p474, %s29, 1
          %s476 = scalar_lea.vmem %s3, %s475
        $region64: #{tpu_custom_call.1} parent=47 // pred_fallthru
          _
      $region48: #{tpu_custom_call.1} parent=5 // pred_fallthru
        _
      %p477 = scmp.le.s32.totalorder 1, %s29
      %p478 = scmp.lt.s32.totalorder %s29, 3
      %p479 = pnand %p477, %p478
      %p480 = pneg %p479
      // Predicated region
      $region65: #{tpu_custom_call.1} parent=5 // pred_check
        _
      $region66: #{tpu_custom_call.1} parent=5 // pred_check_branch
        %482 = sbr.rel (%p479) target = $region68
      $region67: #{tpu_custom_call.1} parent=5 // pred_region
        %s483 = ssub.s32 %s29, 1
        %s484 = sand.u32 %s42, 1
        %s485 = scalar_lea.sflag [#allocation3], %s484
        %s486 = sand.u32 %s42, 1
        %s487 = smul.addr %s486, 8
        %s488 = scalar_lea.vmem [#allocation2], %s487
        // Predicated region
        $region69: #{tpu_custom_call.1} parent=67 // pred_check
          %p489 = pneg %p55
        $region70: #{tpu_custom_call.1} parent=67 // pred_check_branch
          %491 = sbr.rel (%p489) target = $region72
        $region71: #{tpu_custom_call.1} parent=67 // pred_region
          %493 = dma.done %s485, 128
        $region72: #{tpu_custom_call.1} parent=67 // pred_fallthru
          _
        %s494 = sand.u32 %s34, 1
        %s495 = scalar_lea.sflag [#allocation6], %s494
        %s496 = sand.u32 %s68, 1
        %s497 = smul.addr %s496, 8
        %s498 = scalar_lea.vmem [#allocation5], %s497
        // Predicated region
        $region73: #{tpu_custom_call.1} parent=67 // pred_check
          %p499 = pneg %p81
        $region74: #{tpu_custom_call.1} parent=67 // pred_check_branch
          %501 = sbr.rel (%p499) target = $region76
        $region75: #{tpu_custom_call.1} parent=67 // pred_region
          %503 = dma.done %s495, 128
        $region76: #{tpu_custom_call.1} parent=67 // pred_fallthru
          _
        %s504 = sand.u32 %s34, 1
        %s505 = scalar_lea.sflag [#allocation6], %s504
        %s506 = sand.u32 %s94, 1
        %s507 = smul.addr %s506, 8
        %s508 = scalar_lea.vmem [#allocation7], %s507
        // Predicated region
        $region77: #{tpu_custom_call.1} parent=67 // pred_check
          %p509 = pneg %p107
        $region78: #{tpu_custom_call.1} parent=67 // pred_check_branch
          %511 = sbr.rel (%p509) target = $region80
        $region79: #{tpu_custom_call.1} parent=67 // pred_region
          %513 = dma.done %s505, 128
        $region80: #{tpu_custom_call.1} parent=67 // pred_fallthru
          _
        // Predicated region
        $region81: #{tpu_custom_call.1} parent=67 // pred_check
          %p514 = pneg %p154
        $region82: #{tpu_custom_call.1} parent=67 // pred_check_branch
          %516 = sbr.rel (%p514) target = $region84
        $region83: #{tpu_custom_call.1} parent=67 // pred_region
          %518 = dma.done [#allocation9], 512
        $region84: #{tpu_custom_call.1} parent=67 // pred_fallthru
          _
        // Predicated region
        $region85: #{tpu_custom_call.1} parent=67 // pred_check
          %p519 = pneg %p196
        $region86: #{tpu_custom_call.1} parent=67 // pred_check_branch
          %521 = sbr.rel (%p519) target = $region88
        $region87: #{tpu_custom_call.1} parent=67 // pred_region
          %523 = dma.done [#allocation9], 512
        $region88: #{tpu_custom_call.1} parent=67 // pred_fallthru
          _
        // Predicated region
        $region89: #{tpu_custom_call.1} parent=67 // pred_check
          %p524 = pneg %p238
        $region90: #{tpu_custom_call.1} parent=67 // pred_check_branch
          %526 = sbr.rel (%p524) target = $region92
        $region91: #{tpu_custom_call.1} parent=67 // pred_region
          %528 = dma.done [#allocation12], 512
        $region92: #{tpu_custom_call.1} parent=67 // pred_fallthru
          _
        // Predicated region
        $region93: #{tpu_custom_call.1} parent=67 // pred_check
          %p529 = pneg %p280
        $region94: #{tpu_custom_call.1} parent=67 // pred_check_branch
          %531 = sbr.rel (%p529) target = $region96
        $region95: #{tpu_custom_call.1} parent=67 // pred_region
          %533 = dma.done [#allocation12], 512
        $region96: #{tpu_custom_call.1} parent=67 // pred_fallthru
          _
        %s534 = sand.u32 %s42, 1
        %s535 = scalar_lea.sflag [#allocation3], %s534
        %s536 = sand.u32 %s42, 1
        %s537 = smul.addr %s536, 8
        %s538 = scalar_lea.vmem [#allocation2], %s537
        %p539 = pneg %p55
        %p540 = pneg %p52
        %s541 = sand.u32 %s34, 1
        %s542 = scalar_lea.sflag [#allocation6], %s541
        %s543 = sand.u32 %s68, 1
        %s544 = smul.addr %s543, 8
        %s545 = scalar_lea.vmem [#allocation5], %s544
        %p546 = pneg %p81
        %p547 = pneg %p78
        %s548 = sand.u32 %s34, 1
        %s549 = scalar_lea.sflag [#allocation6], %s548
        %s550 = sand.u32 %s94, 1
        %s551 = smul.addr %s550, 8
        %s552 = scalar_lea.vmem [#allocation7], %s551
        %p553 = pneg %p107
        %p554 = pneg %p104
        %p555 = scmp.lt.s32.totalorder %s34, 1
        %s556 = scalar_select %p555, %s34, 1
        %s557 = scalar_lea.vmem %s3, %s556
        %p558 = pneg %p133
        %p559 = pneg %p130
        %p560 = pneg %p154
        %p561 = pneg %p151
        %p562 = pneg %p175
        %p563 = pneg %p172
        %p564 = pneg %p196
        %p565 = pneg %p193
        %p566 = pneg %p217
        %p567 = pneg %p214
        %p568 = pneg %p238
        %p569 = pneg %p235
        %p570 = pneg %p259
        %p571 = pneg %p256
        %p572 = pneg %p280
        %p573 = pneg %p277
        %p574 = pneg %p301
        %p575 = pneg %p298
        %p576 = pneg %p327
        %p577 = pneg %p324
        %s578 = sand.u32 %s314, 1
        %s579 = scalar_lea.sflag [#allocation4], %s578
        %s580 = sand.u32 %s314, 1
        %s581 = smul.addr %s580, 8
        %s582 = scalar_lea.vmem [#allocation14], %s581
        %p583 = scmp.lt.s32.totalorder %s34, 1
        %s584 = scalar_select %p583, %s34, 1
        %s585 = scalar_lea.vmem %s3, %s584
        %v586 = vld [vmem:[%s488] sm:$0xff]
        %v587 = vld [vmem:[%s498] sm:$0xff]
        %v588 = vld [vmem:[%s508] sm:$0xff]
        %v589 = vld [vmem:[#allocation8] sm:$0xff]
        %v590 = vld [vmem:[#allocation8 + $0x8] sm:$0xff]
        %v591 = vld [vmem:[#allocation8 + $0x10] sm:$0xff]
        %v592 = vld [vmem:[#allocation8 + $0x18] sm:$0xff]
        %v593 = vld [vmem:[%s5] sm:$0x1]
        %v595 = vperm.slane %v593, 0
        %vm597 = vcmask 261120
        %v599 = vsel %vm597, %v586, 0
        %601 = vmatpush.msra.mxu0 0.0
        %602 = vmatpush.msra.mxu0 0.0
        %603 = vmatpush.msra.mxu0 0.0
        %604 = vmatpush.msra.mxu0 0.0
        %605 = vmatpush.msra.mxu0 0.0
        %606 = vmatpush.msra.mxu0 0.0
        %607 = vmatpush.msra.mxu0 0.0
        %608 = vmatpush.msra.mxu0 0.0
        %609 = vmatpush.msra.mxu0 0.0
        %610 = vmatpush.msra.mxu0 0.0
        %611 = vmatpush.msra.mxu0 0.0
        %612 = vmatpush.msra.mxu0 0.0
        %613 = vmatpush.msra.mxu0 %v592
        %614 = vmatpush.msra.mxu0 %v591
        %615 = vmatpush.msra.mxu0 %v590
        %616 = vmatpush.msra.mxu0 %v589
        %617 = vmatmul.f32.gmra.mxu0 %v599
        %v618 = vpop.f32.mrf.mxu0
        %v619 = vadd.f32 %v595, %v618
        %620 = vdwg.mxu0
        %v621 = vld [vmem:[#allocation10] sm:$0xff]
        %v622 = vld [vmem:[#allocation10 + $0x8] sm:$0xff]
        %v623 = vld [vmem:[#allocation10 + $0x10] sm:$0xff]
        %v624 = vld [vmem:[#allocation10 + $0x18] sm:$0xff]
        %v625 = vld [vmem:[%s7] sm:$0x1]
        %v627 = vperm.slane %v625, 0
        %v630 = vsel %vm597, %v587, 0
        %632 = vmatpush.msra.mxu0 0.0
        %633 = vmatpush.msra.mxu0 0.0
        %634 = vmatpush.msra.mxu0 0.0
        %635 = vmatpush.msra.mxu0 0.0
        %636 = vmatpush.msra.mxu0 0.0
        %637 = vmatpush.msra.mxu0 0.0
        %638 = vmatpush.msra.mxu0 0.0
        %639 = vmatpush.msra.mxu0 0.0
        %640 = vmatpush.msra.mxu0 0.0
        %641 = vmatpush.msra.mxu0 0.0
        %642 = vmatpush.msra.mxu0 0.0
        %643 = vmatpush.msra.mxu0 0.0
        %644 = vmatpush.msra.mxu0 %v624
        %645 = vmatpush.msra.mxu0 %v623
        %646 = vmatpush.msra.mxu0 %v622
        %647 = vmatpush.msra.mxu0 %v621
        %648 = vmatmul.f32.gmra.mxu0 %v630
        %v649 = vpop.f32.mrf.mxu0
        %v650 = vadd.f32 %v627, %v649
        %651 = vdwg.mxu0
        %v652 = vld [vmem:[#allocation11] sm:$0xff]
        %v653 = vld [vmem:[#allocation11 + $0x8] sm:$0xff]
        %v654 = vld [vmem:[#allocation11 + $0x10] sm:$0xff]
        %v655 = vld [vmem:[#allocation11 + $0x18] sm:$0xff]
        %v656 = vld [vmem:[%s9] sm:$0x1]
        %v658 = vperm.slane %v656, 0
        %v661 = vsel %vm597, %v588, 0
        %663 = vmatpush.msra.mxu0 0.0
        %664 = vmatpush.msra.mxu0 0.0
        %665 = vmatpush.msra.mxu0 0.0
        %666 = vmatpush.msra.mxu0 0.0
        %667 = vmatpush.msra.mxu0 0.0
        %668 = vmatpush.msra.mxu0 0.0
        %669 = vmatpush.msra.mxu0 0.0
        %670 = vmatpush.msra.mxu0 0.0
        %671 = vmatpush.msra.mxu0 0.0
        %672 = vmatpush.msra.mxu0 0.0
        %673 = vmatpush.msra.mxu0 0.0
        %674 = vmatpush.msra.mxu0 0.0
        %675 = vmatpush.msra.mxu0 %v655
        %676 = vmatpush.msra.mxu0 %v654
        %677 = vmatpush.msra.mxu0 %v653
        %678 = vmatpush.msra.mxu0 %v652
        %679 = vmatmul.f32.gmra.mxu0 %v661
        %v680 = vpop.f32.mrf.mxu0
        %v681 = vadd.f32 %v658, %v680
        %682 = vdwg.mxu0
        %v683 = vld [vmem:[%s585] sm:$0x1]
        %vm684 = vcmp.gt.f32.partialorder %v683, 0.0
        %v685 = vld [vmem:[#allocation13] sm:$0xff]
        %v686 = vld [vmem:[#allocation13 + $0x8] sm:$0xff]
        %v687 = vld [vmem:[#allocation13 + $0x10] sm:$0xff]
        %v688 = vld [vmem:[#allocation13 + $0x18] sm:$0xff]
        %vm689 = vcmask 64512
        %v691 = vsel %vm689, %v619, 0
        %v694 = vsel %vm689, %v650, 0
        %696 = vmatpush.xpose.msra.mxu0 0.0
        %697 = vmatpush.xpose.msra.mxu0 0.0
        %698 = vmatpush.xpose.msra.mxu0 0.0
        %699 = vmatpush.xpose.msra.mxu0 0.0
        %700 = vmatpush.xpose.msra.mxu0 0.0
        %701 = vmatpush.xpose.msra.mxu0 0.0
        %702 = vmatpush.xpose.msra.mxu0 0.0
        %703 = vmatpush.xpose.msra.mxu0 0.0
        %704 = vmatpush.xpose.msra.mxu0 0.0
        %705 = vmatpush.xpose.msra.mxu0 0.0
        %706 = vmatpush.xpose.msra.mxu0 0.0
        %707 = vmatpush.xpose.msra.mxu0 0.0
        %708 = vmatpush.xpose.msra.mxu0 0.0
        %709 = vmatpush.xpose.msra.mxu0 0.0
        %710 = vmatpush.xpose.msra.mxu0 0.0
        %711 = vmatpush.xpose.msra.mxu0 %v694
        %712 = vmatmul.f32.gmra.mxu0 %v691
        %v713 = vpop.f32.mrf.mxu0
        %v714 = vadd.f32 0.0, %v713
        %715 = vdwg.mxu0
        %v716 = vsel %vm684, 1, 0
        %v717 = vperm.slane %v716, 0
        %vm718 = vcmp.eq.s32.totalorder %v717, 1
        %v719 = vsel %vm718, -1e+09, %v714
        %v720 = vsel %vm689, %v719, -inf
        %721 = vmax.xlane.f32.xlu0 %v720
        %v722 = vpop.xlane.xlu0 %721
        %v723 = vsub.f32 %v719, %v722
        %v724 = vmul.f32 %v723, 1.442695
        %v725 = vpow.pop %v724
        %v726 = vsel %vm689, %v725, 0.0
        %727 = vadd.xlane.f32.xlu0 %v726
        %v728 = vpop.xlane.xlu0 %727
        %v729 = vrcp.pop %v728
        %v730 = vmul.f32 %v728, %v729
        %v731 = vsub.f32 1.0, %v730
        %v732 = vmul.f32 %v729, %v731
        %v733 = vadd.f32 %v729, %v732
        %vm734 = vweird.f32 %v728
        %vm735 = vweird.f32 %v729
        %vm736 = vmor %vm734, %vm735
        %v737 = vsel %vm736, %v729, %v733
        %v738 = vand.u32 2147483647, %v728
        %vm739 = vcmp.eq.f32.partialorder %v738, 8.507059e+37
        %v740 = vand.u32 %v728, 2147483648
        %v741 = vor.u32 1.1754944e-38, %v740
        %v742 = vsel %vm739, %v741, %v737
        %v743 = vmul.f32 %v725, %v742
        %v745 = vsel %vm689, %v743, 0
        %747 = vmatpush.msra.mxu0 0.0
        %748 = vmatpush.msra.mxu0 0.0
        %749 = vmatpush.msra.mxu0 0.0
        %750 = vmatpush.msra.mxu0 0.0
        %751 = vmatpush.msra.mxu0 0.0
        %752 = vmatpush.msra.mxu0 0.0
        %753 = vmatpush.msra.mxu0 0.0
        %754 = vmatpush.msra.mxu0 0.0
        %755 = vmatpush.msra.mxu0 0.0
        %756 = vmatpush.msra.mxu0 0.0
        %757 = vmatpush.msra.mxu0 0.0
        %758 = vmatpush.msra.mxu0 0.0
        %759 = vmatpush.msra.mxu0 0.0
        %760 = vmatpush.msra.mxu0 0.0
        %761 = vmatpush.msra.mxu0 0.0
        %762 = vmatpush.msra.mxu0 %v681
        %763 = vmatmul.f32.gmra.mxu0 %v745
        %v764 = vpop.f32.mrf.mxu0
        %v765 = vadd.f32 0.0, %v764
        %766 = vdwg.mxu0
        %767 = vrot.lane.b32.xlu0 %v619, 120
        %v768 = vpop.permute.xlu0 %767
        %769 = vrot.lane.b32.xlu0 %v650, 120
        %v770 = vpop.permute.xlu0 %769
        %v771 = vsel %vm689, %v768, 0
        %v773 = vsel %vm689, %v770, 0
        %775 = vmatpush.xpose.msra.mxu0 0.0
        %776 = vmatpush.xpose.msra.mxu0 0.0
        %777 = vmatpush.xpose.msra.mxu0 0.0
        %778 = vmatpush.xpose.msra.mxu0 0.0
        %779 = vmatpush.xpose.msra.mxu0 0.0
        %780 = vmatpush.xpose.msra.mxu0 0.0
        %781 = vmatpush.xpose.msra.mxu0 0.0
        %782 = vmatpush.xpose.msra.mxu0 0.0
        %783 = vmatpush.xpose.msra.mxu0 0.0
        %784 = vmatpush.xpose.msra.mxu0 0.0
        %785 = vmatpush.xpose.msra.mxu0 0.0
        %786 = vmatpush.xpose.msra.mxu0 0.0
        %787 = vmatpush.xpose.msra.mxu0 0.0
        %788 = vmatpush.xpose.msra.mxu0 0.0
        %789 = vmatpush.xpose.msra.mxu0 0.0
        %790 = vmatpush.xpose.msra.mxu0 %v773
        %791 = vmatmul.f32.gmra.mxu0 %v771
        %v792 = vpop.f32.mrf.mxu0
        %v793 = vadd.f32 0.0, %v792
        %794 = vdwg.mxu0
        %v795 = vsel %vm718, -1e+09, %v793
        %v796 = vsel %vm689, %v795, -inf
        %797 = vmax.xlane.f32.xlu0 %v796
        %v798 = vpop.xlane.xlu0 %797
        %v799 = vsub.f32 %v795, %v798
        %v800 = vmul.f32 %v799, 1.442695
        %v801 = vpow.pop %v800
        %v802 = vsel %vm689, %v801, 0.0
        %803 = vadd.xlane.f32.xlu0 %v802
        %v804 = vpop.xlane.xlu0 %803
        %v805 = vrcp.pop %v804
        %v806 = vmul.f32 %v804, %v805
        %v807 = vsub.f32 1.0, %v806
        %v808 = vmul.f32 %v805, %v807
        %v809 = vadd.f32 %v805, %v808
        %vm810 = vweird.f32 %v804
        %vm811 = vweird.f32 %v805
        %vm812 = vmor %vm810, %vm811
        %v813 = vsel %vm812, %v805, %v809
        %v814 = vand.u32 2147483647, %v804
        %vm815 = vcmp.eq.f32.partialorder %v814, 8.507059e+37
        %v816 = vand.u32 %v804, 2147483648
        %v817 = vor.u32 1.1754944e-38, %v816
        %v818 = vsel %vm815, %v817, %v813
        %v819 = vmul.f32 %v801, %v818
        %821 = vrot.lane.b32.xlu0 %v681, 120
        %v822 = vpop.permute.xlu0 %821
        %v825 = vsel %vm689, %v819, 0
        %827 = vmatpush.msra.mxu0 0.0
        %828 = vmatpush.msra.mxu0 0.0
        %829 = vmatpush.msra.mxu0 0.0
        %830 = vmatpush.msra.mxu0 0.0
        %831 = vmatpush.msra.mxu0 0.0
        %832 = vmatpush.msra.mxu0 0.0
        %833 = vmatpush.msra.mxu0 0.0
        %834 = vmatpush.msra.mxu0 0.0
        %835 = vmatpush.msra.mxu0 0.0
        %836 = vmatpush.msra.mxu0 0.0
        %837 = vmatpush.msra.mxu0 0.0
        %838 = vmatpush.msra.mxu0 0.0
        %839 = vmatpush.msra.mxu0 0.0
        %840 = vmatpush.msra.mxu0 0.0
        %841 = vmatpush.msra.mxu0 0.0
        %842 = vmatpush.msra.mxu0 %v822
        %843 = vmatmul.f32.gmra.mxu0 %v825
        %v844 = vpop.f32.mrf.mxu0
        %v845 = vadd.f32 0.0, %v844
        %846 = vdwg.mxu0
        %v848 = vsel %vm689, %v845, 0
        %850 = vmatpush.msra.mxu0 0.0
        %851 = vmatpush.msra.mxu0 0.0
        %852 = vmatpush.msra.mxu0 0.0
        %853 = vmatpush.msra.mxu0 0.0
        %854 = vmatpush.msra.mxu0 0.0
        %855 = vmatpush.msra.mxu0 0.0
        %856 = vmatpush.msra.mxu0 0.0
        %857 = vmatpush.msra.mxu0 0.0
        %858 = vmatpush.msra.mxu0 0.0
        %859 = vmatpush.msra.mxu0 0.0
        %860 = vmatpush.msra.mxu0 0.0
        %861 = vmatpush.msra.mxu0 0.0
        %862 = vmatpush.msra.mxu0 0.0
        %863 = vmatpush.msra.mxu0 0.0
        %864 = vmatpush.msra.mxu0 0.0
        %865 = vmatpush.msra.mxu0 %v686
        %866 = vmatmul.f32.gmra.mxu0 %v848
        %v867 = vpop.f32.mrf.mxu0
        %v868 = vadd.f32 0.0, %v867
        %869 = vdwg.mxu0
        %v871 = vsel %vm689, %v765, 0
        %873 = vmatpush.msra.mxu0 0.0
        %874 = vmatpush.msra.mxu0 0.0
        %875 = vmatpush.msra.mxu0 0.0
        %876 = vmatpush.msra.mxu0 0.0
        %877 = vmatpush.msra.mxu0 0.0
        %878 = vmatpush.msra.mxu0 0.0
        %879 = vmatpush.msra.mxu0 0.0
        %880 = vmatpush.msra.mxu0 0.0
        %881 = vmatpush.msra.mxu0 0.0
        %882 = vmatpush.msra.mxu0 0.0
        %883 = vmatpush.msra.mxu0 0.0
        %884 = vmatpush.msra.mxu0 0.0
        %885 = vmatpush.msra.mxu0 0.0
        %886 = vmatpush.msra.mxu0 0.0
        %887 = vmatpush.msra.mxu0 0.0
        %888 = vmatpush.msra.mxu0 %v685
        %889 = vmatmul.f32.gmra.mxu0 %v871
        %v890 = vpop.f32.mrf.mxu0
        %v891 = vadd.f32 %v868, %v890
        %892 = vdwg.mxu0
        %893 = vrot.lane.b32.xlu0 %v619, 112
        %v894 = vpop.permute.xlu0 %893
        %895 = vrot.lane.b32.xlu0 %v650, 112
        %v896 = vpop.permute.xlu0 %895
        %v897 = vsel %vm689, %v894, 0
        %v899 = vsel %vm689, %v896, 0
        %901 = vmatpush.xpose.msra.mxu0 0.0
        %902 = vmatpush.xpose.msra.mxu0 0.0
        %903 = vmatpush.xpose.msra.mxu0 0.0
        %904 = vmatpush.xpose.msra.mxu0 0.0
        %905 = vmatpush.xpose.msra.mxu0 0.0
        %906 = vmatpush.xpose.msra.mxu0 0.0
        %907 = vmatpush.xpose.msra.mxu0 0.0
        %908 = vmatpush.xpose.msra.mxu0 0.0
        %909 = vmatpush.xpose.msra.mxu0 0.0
        %910 = vmatpush.xpose.msra.mxu0 0.0
        %911 = vmatpush.xpose.msra.mxu0 0.0
        %912 = vmatpush.xpose.msra.mxu0 0.0
        %913 = vmatpush.xpose.msra.mxu0 0.0
        %914 = vmatpush.xpose.msra.mxu0 0.0
        %915 = vmatpush.xpose.msra.mxu0 0.0
        %916 = vmatpush.xpose.msra.mxu0 %v899
        %917 = vmatmul.f32.gmra.mxu0 %v897
        %v918 = vpop.f32.mrf.mxu0
        %v919 = vadd.f32 0.0, %v918
        %920 = vdwg.mxu0
        %v921 = vsel %vm718, -1e+09, %v919
        %v922 = vsel %vm689, %v921, -inf
        %923 = vmax.xlane.f32.xlu0 %v922
        %v924 = vpop.xlane.xlu0 %923
        %v925 = vsub.f32 %v921, %v924
        %v926 = vmul.f32 %v925, 1.442695
        %v927 = vpow.pop %v926
        %v928 = vsel %vm689, %v927, 0.0
        %929 = vadd.xlane.f32.xlu0 %v928
        %v930 = vpop.xlane.xlu0 %929
        %v931 = vrcp.pop %v930
        %v932 = vmul.f32 %v930, %v931
        %v933 = vsub.f32 1.0, %v932
        %v934 = vmul.f32 %v931, %v933
        %v935 = vadd.f32 %v931, %v934
        %vm936 = vweird.f32 %v930
        %vm937 = vweird.f32 %v931
        %vm938 = vmor %vm936, %vm937
        %v939 = vsel %vm938, %v931, %v935
        %v940 = vand.u32 2147483647, %v930
        %vm941 = vcmp.eq.f32.partialorder %v940, 8.507059e+37
        %v942 = vand.u32 %v930, 2147483648
        %v943 = vor.u32 1.1754944e-38, %v942
        %v944 = vsel %vm941, %v943, %v939
        %v945 = vmul.f32 %v927, %v944
        %946 = vrot.lane.b32.xlu0 %v681, 112
        %v947 = vpop.permute.xlu0 %946
        %v950 = vsel %vm689, %v945, 0
        %952 = vmatpush.msra.mxu0 0.0
        %953 = vmatpush.msra.mxu0 0.0
        %954 = vmatpush.msra.mxu0 0.0
        %955 = vmatpush.msra.mxu0 0.0
        %956 = vmatpush.msra.mxu0 0.0
        %957 = vmatpush.msra.mxu0 0.0
        %958 = vmatpush.msra.mxu0 0.0
        %959 = vmatpush.msra.mxu0 0.0
        %960 = vmatpush.msra.mxu0 0.0
        %961 = vmatpush.msra.mxu0 0.0
        %962 = vmatpush.msra.mxu0 0.0
        %963 = vmatpush.msra.mxu0 0.0
        %964 = vmatpush.msra.mxu0 0.0
        %965 = vmatpush.msra.mxu0 0.0
        %966 = vmatpush.msra.mxu0 0.0
        %967 = vmatpush.msra.mxu0 %v947
        %968 = vmatmul.f32.gmra.mxu0 %v950
        %v969 = vpop.f32.mrf.mxu0
        %v970 = vadd.f32 0.0, %v969
        %971 = vdwg.mxu0
        %v973 = vsel %vm689, %v970, 0
        %975 = vmatpush.msra.mxu0 0.0
        %976 = vmatpush.msra.mxu0 0.0
        %977 = vmatpush.msra.mxu0 0.0
        %978 = vmatpush.msra.mxu0 0.0
        %979 = vmatpush.msra.mxu0 0.0
        %980 = vmatpush.msra.mxu0 0.0
        %981 = vmatpush.msra.mxu0 0.0
        %982 = vmatpush.msra.mxu0 0.0
        %983 = vmatpush.msra.mxu0 0.0
        %984 = vmatpush.msra.mxu0 0.0
        %985 = vmatpush.msra.mxu0 0.0
        %986 = vmatpush.msra.mxu0 0.0
        %987 = vmatpush.msra.mxu0 0.0
        %988 = vmatpush.msra.mxu0 0.0
        %989 = vmatpush.msra.mxu0 0.0
        %990 = vmatpush.msra.mxu0 %v687
        %991 = vmatmul.f32.gmra.mxu0 %v973
        %v992 = vpop.f32.mrf.mxu0
        %v993 = vadd.f32 0.0, %v992
        %994 = vdwg.mxu0
        %v995 = vadd.f32 %v891, %v993
        %996 = vrot.lane.b32.xlu0 %v619, 104
        %v997 = vpop.permute.xlu0 %996
        %998 = vrot.lane.b32.xlu0 %v650, 104
        %v999 = vpop.permute.xlu0 %998
        %v1000 = vsel %vm689, %v997, 0
        %v1002 = vsel %vm689, %v999, 0
        %1004 = vmatpush.xpose.msra.mxu0 0.0
        %1005 = vmatpush.xpose.msra.mxu0 0.0
        %1006 = vmatpush.xpose.msra.mxu0 0.0
        %1007 = vmatpush.xpose.msra.mxu0 0.0
        %1008 = vmatpush.xpose.msra.mxu0 0.0
        %1009 = vmatpush.xpose.msra.mxu0 0.0
        %1010 = vmatpush.xpose.msra.mxu0 0.0
        %1011 = vmatpush.xpose.msra.mxu0 0.0
        %1012 = vmatpush.xpose.msra.mxu0 0.0
        %1013 = vmatpush.xpose.msra.mxu0 0.0
        %1014 = vmatpush.xpose.msra.mxu0 0.0
        %1015 = vmatpush.xpose.msra.mxu0 0.0
        %1016 = vmatpush.xpose.msra.mxu0 0.0
        %1017 = vmatpush.xpose.msra.mxu0 0.0
        %1018 = vmatpush.xpose.msra.mxu0 0.0
        %1019 = vmatpush.xpose.msra.mxu0 %v1002
        %1020 = vmatmul.f32.gmra.mxu0 %v1000
        %v1021 = vpop.f32.mrf.mxu0
        %v1022 = vadd.f32 0.0, %v1021
        %1023 = vdwg.mxu0
        %v1024 = vsel %vm718, -1e+09, %v1022
        %v1025 = vsel %vm689, %v1024, -inf
        %1026 = vmax.xlane.f32.xlu0 %v1025
        %v1027 = vpop.xlane.xlu0 %1026
        %v1028 = vsub.f32 %v1024, %v1027
        %v1029 = vmul.f32 %v1028, 1.442695
        %v1030 = vpow.pop %v1029
        %v1031 = vsel %vm689, %v1030, 0.0
        %1032 = vadd.xlane.f32.xlu0 %v1031
        %v1033 = vpop.xlane.xlu0 %1032
        %v1034 = vrcp.pop %v1033
        %v1035 = vmul.f32 %v1033, %v1034
        %v1036 = vsub.f32 1.0, %v1035
        %v1037 = vmul.f32 %v1034, %v1036
        %v1038 = vadd.f32 %v1034, %v1037
        %vm1039 = vweird.f32 %v1033
        %vm1040 = vweird.f32 %v1034
        %vm1041 = vmor %vm1039, %vm1040
        %v1042 = vsel %vm1041, %v1034, %v1038
        %v1043 = vand.u32 2147483647, %v1033
        %vm1044 = vcmp.eq.f32.partialorder %v1043, 8.507059e+37
        %v1045 = vand.u32 %v1033, 2147483648
        %v1046 = vor.u32 1.1754944e-38, %v1045
        %v1047 = vsel %vm1044, %v1046, %v1042
        %v1048 = vmul.f32 %v1030, %v1047
        %1049 = vrot.lane.b32.xlu0 %v681, 104
        %v1050 = vpop.permute.xlu0 %1049
        %v1053 = vsel %vm689, %v1048, 0
        %1055 = vmatpush.msra.mxu0 0.0
        %1056 = vmatpush.msra.mxu0 0.0
        %1057 = vmatpush.msra.mxu0 0.0
        %1058 = vmatpush.msra.mxu0 0.0
        %1059 = vmatpush.msra.mxu0 0.0
        %1060 = vmatpush.msra.mxu0 0.0
        %1061 = vmatpush.msra.mxu0 0.0
        %1062 = vmatpush.msra.mxu0 0.0
        %1063 = vmatpush.msra.mxu0 0.0
        %1064 = vmatpush.msra.mxu0 0.0
        %1065 = vmatpush.msra.mxu0 0.0
        %1066 = vmatpush.msra.mxu0 0.0
        %1067 = vmatpush.msra.mxu0 0.0
        %1068 = vmatpush.msra.mxu0 0.0
        %1069 = vmatpush.msra.mxu0 0.0
        %1070 = vmatpush.msra.mxu0 %v1050
        %1071 = vmatmul.f32.gmra.mxu0 %v1053
        %v1072 = vpop.f32.mrf.mxu0
        %v1073 = vadd.f32 0.0, %v1072
        %1074 = vdwg.mxu0
        %v1076 = vsel %vm689, %v1073, 0
        %1078 = vmatpush.msra.mxu0 0.0
        %1079 = vmatpush.msra.mxu0 0.0
        %1080 = vmatpush.msra.mxu0 0.0
        %1081 = vmatpush.msra.mxu0 0.0
        %1082 = vmatpush.msra.mxu0 0.0
        %1083 = vmatpush.msra.mxu0 0.0
        %1084 = vmatpush.msra.mxu0 0.0
        %1085 = vmatpush.msra.mxu0 0.0
        %1086 = vmatpush.msra.mxu0 0.0
        %1087 = vmatpush.msra.mxu0 0.0
        %1088 = vmatpush.msra.mxu0 0.0
        %1089 = vmatpush.msra.mxu0 0.0
        %1090 = vmatpush.msra.mxu0 0.0
        %1091 = vmatpush.msra.mxu0 0.0
        %1092 = vmatpush.msra.mxu0 0.0
        %1093 = vmatpush.msra.mxu0 %v688
        %1094 = vmatmul.f32.gmra.mxu0 %v1076
        %v1095 = vpop.f32.mrf.mxu0
        %v1096 = vadd.f32 0.0, %v1095
        %1097 = vdwg.mxu0
        %v1098 = vadd.f32 %v995, %v1096
        %v1099 = vld [vmem:[%s11] sm:$0x1]
        %v1101 = vperm.slane %v1099, 0
        %v1103 = vadd.f32 %v1098, %v1101
        %1104 = vst.msk [vmem:[%s582] sm:$0xff] %vm597, %v1103
        %s1105 = sand.u32 %s314, 1
        %s1106 = scalar_lea.sflag [#allocation4], %s1105
        %s1107 = sand.u32 %s314, 1
        %s1108 = smul.addr %s1107, 8
        %s1109 = scalar_lea.vmem [#allocation14], %s1108
        // Predicated region
        $region97: #{tpu_custom_call.1} parent=67 // pred_check
          %p1110 = pneg %p324
        $region98: #{tpu_custom_call.1} parent=67 // pred_check_branch
          %1112 = sbr.rel (%p1110) target = $region100
        $region99: #{tpu_custom_call.1} parent=67 // pred_region
          %1114 = vsyncadd %s1106, 0
          %s1115 = smul.addr %s34, 8
          %s1116 = scalar_lea.hbm %s12, %s1115
          %s1118 = sshll.u32 %s1109, 4
          %s1119 = int_to_ptr.vmem [resolvable:$true] %s1118
          %s1120 = sshll.u32 %s1116, 4
          %s1121 = int_to_ptr.hbm [resolvable:$true] %s1120
          %1123 = dma.vmem_to_hbm [thread:$0]  %s1119, 128, %s1121, %s1106
        $region100: #{tpu_custom_call.1} parent=67 // pred_fallthru
          _
      $region68: #{tpu_custom_call.1} parent=5 // pred_fallthru
        _
      %p1124 = scmp.le.s32.totalorder 2, %s29
      // Predicated region
      $region101: #{tpu_custom_call.1} parent=5 // pred_check
        %p1125 = pneg %p1124
      $region102: #{tpu_custom_call.1} parent=5 // pred_check_branch
        %1127 = sbr.rel (%p1125) target = $region104
      $region103: #{tpu_custom_call.1} parent=5 // pred_region
        %s1128 = ssub.s32 %s29, 2
        // Predicated region
        $region105: #{tpu_custom_call.1} parent=103 // pred_check
          %p1129 = pneg %p330
        $region106: #{tpu_custom_call.1} parent=103 // pred_check_branch
          %1131 = sbr.rel (%p1129) target = $region108
        $region107: #{tpu_custom_call.1} parent=103 // pred_region
          %s1132 = sand.u32 %s315, 1
          %s1133 = scalar_lea.sflag [#allocation4], %s1132
          %s1134 = sand.u32 %s315, 1
          %s1135 = smul.addr %s1134, 8
          %s1136 = scalar_lea.vmem [#allocation14], %s1135
          %1138 = dma.done %s1133, 128
        $region108: #{tpu_custom_call.1} parent=103 // pred_fallthru
          _
      $region104: #{tpu_custom_call.1} parent=5 // pred_fallthru
        _
    $region6: #{tpu_custom_call.1} parent=1 // loop_footer
      %s33 = sadd.s32 1, %s29
    $region7: #{tpu_custom_call.1} parent=1 // loop_footer_branch
      %28 = sbr.rel target = $region3
    $region8: #{tpu_custom_call.1} parent=1 // loop_exit
      _
    %1139 = vsyncpa [#allocation3], 1
    %s1140 = scalar_lea.sflag [#allocation3], 1
    %1141 = vsyncpa %s1140, 1
    %1142 = vsyncpa [#allocation6], 1
    %s1143 = scalar_lea.sflag [#allocation6], 1
    %1144 = vsyncpa %s1143, 1
    %1145 = vsyncpa [#allocation9], 1
    %1146 = vsyncpa [#allocation12], 1
    %1147 = vsyncpa [#allocation4], 1
    %s1148 = scalar_lea.sflag [#allocation4], 1
    %1149 = vsyncpa %s1148, 1

</llo_original>
